<compile_context>
chip_gen: v5e
topology: v5e:2x2
jax: 0.10.0
libtpu: 0.0.40
codegen_flags: <defaults>
</compile_context>

<pallas_src>
import jax
import jax.numpy as jnp
from jax import lax
from jax.experimental import pallas as pl
from jax.experimental.pallas import tpu as pltpu

# ---------------- model dims (small, consistent with the forward) ----------
B, C_IN, H, W = 2, 4, 16, 16
C_MID = 8
N_CLASSES = 10
HW = H * W
S = B * HW            # 512 flattened (b, h, w) positions -> lane axis
PAD = W + 1           # flat padding so every 3x3 tap offset is a valid slice
SP = S + 2 * PAD      # padded flat width
W_SHIFT = 4           # W == 16 == 1 << 4 (power-of-two spatial dims)
assert (1 << W_SHIFT) == W and H == W


# ---------------- fused Pallas kernel ---------------------------------------
def fused_forward_kernel(x_ref, w1_ref, b1_ref, w2_ref, b2_ref,
                         fcw_ref, fcb_ref, pool_ref, o_ref, ypad_ref):
    # Border masks shared by both convs: 1 where the 3x3 tap stays inside the
    # same image, 0 where SAME padding would have supplied a zero.
    lane = lax.broadcasted_iota(jnp.int32, (1, S), 1)          # flat index s
    ww = jnp.bitwise_and(lane, W - 1)                          # s % W
    hh = jnp.bitwise_and(jnp.right_shift(lane, W_SHIFT), H - 1)  # (s // W) % H
    masks = []
    for ky in range(3):
        for kx in range(3):
            dy, dx = ky - 1, kx - 1
            valid = ((hh + dy >= 0) & (hh + dy < H) &
                     (ww + dx >= 0) & (ww + dx < W))
            masks.append(jnp.where(valid, 1.0, 0.0))           # (1, S) f32

    def conv3x3_relu(src_ref, w_ref, b_ref):
        # src_ref: (C_MID, SP) flat-padded activations (channel-major)
        # w_ref:   (C_MID, 9*C_MID)   b_ref: (C_MID, 1)
        cols = []
        k = 0
        for ky in range(3):
            for kx in range(3):
                off = (ky - 1) * W + (kx - 1)
                piece = src_ref[:, PAD + off:PAD + off + S]    # (C_MID, S)
                cols.append(piece * masks[k])
                k += 1
        p = jnp.concatenate(cols, axis=0)                      # (9*C_MID, S)
        y = jnp.dot(w_ref[...], p, preferred_element_type=jnp.float32)
        return jnp.maximum(y + b_ref[...], 0.0)                # (C_MID, S)

    # conv1 + ReLU (input channels were zero-padded 4 -> 8 outside)
    y1 = conv3x3_relu(x_ref, w1_ref, b1_ref)

    # keep the intermediate on-chip: stash it flat-padded in VMEM scratch so
    # layer1's taps are again static slices
    ypad_ref[...] = jnp.zeros_like(ypad_ref)
    ypad_ref[:, PAD:PAD + S] = y1

    # layer1: conv + ReLU
    y2 = conv3x3_relu(ypad_ref, w2_ref, b2_ref)                # (C_MID, S)

    # adaptive average pool as an MXU matmul with a per-image 1/HW matrix
    pooled = jnp.dot(y2, pool_ref[...],
                     preferred_element_type=jnp.float32)       # (C_MID, B)

    # fc: (N_CLASSES, C_MID) @ (C_MID, B) + bias
    o_ref[...] = jnp.dot(fcw_ref[...], pooled,
                         preferred_element_type=jnp.float32) + fcb_ref[...]


# ---------------- wrapper ----------------------------------------------------
def forward_pallas(x_nchw, params):
    w1, b1, w2, b2, fcw, fcb = params

    # layout plumbing (tiny XLA ops before the single kernel launch)
    x_t = jnp.transpose(x_nchw, (1, 0, 2, 3)).reshape(C_IN, S)     # (C_IN, S)
    x_pad = jnp.pad(x_t, ((0, C_MID - C_IN), (PAD, PAD)))          # (C_MID, SP)

    w1p = jnp.pad(w1, ((0, 0), (0, 0), (0, C_MID - C_IN), (0, 0))) # pad Cin->8
    w1t = w1p.reshape(9 * C_MID, C_MID).T                          # (C_MID, 72)
    w2t = w2.reshape(9 * C_MID, C_MID).T                           # (C_MID, 72)
    b1c = b1[:, None]                                              # (C_MID, 1)
    b2c = b2[:, None]
    fcwt = fcw.T                                                   # (N, C_MID)
    fcbc = fcb[:, None]                                            # (N, 1)
    pool = ((jnp.arange(S)[:, None] // HW) ==
            jnp.arange(B)[None, :]).astype(jnp.float32) / HW       # (S, B)

    logits_t = pl.pallas_call(
        fused_forward_kernel,
        out_shape=jax.ShapeDtypeStruct((N_CLASSES, B), jnp.float32),
        scratch_shapes=[pltpu.VMEM((C_MID, SP), jnp.float32)],
    )(x_pad, w1t, b1c, w2t, b2c, fcwt, fcbc, pool)
    return logits_t.T                                              # (B, N)


def forward_ref(x_nchw, params):
    # Pure-JAX reference (lax conv), mirrors the PyTorch forward exactly.
    w1, b1, w2, b2, fcw, fcb = params
    x = jnp.transpose(x_nchw, (0, 2, 3, 1))
    dn = ("NHWC", "HWIO", "NHWC")
    y = lax.conv_general_dilated(x, w1, (1, 1), "SAME", dimension_numbers=dn) + b1
    y = jnp.maximum(y, 0.0)
    y = lax.conv_general_dilated(y, w2, (1, 1), "SAME", dimension_numbers=dn) + b2
    y = jnp.maximum(y, 0.0)
    pooled = jnp.mean(y, axis=(1, 2))                  # AdaptiveAvgPool2d(1) + flatten
    return pooled @ fcw + fcb


if __name__ == "__main__":
    key = jax.random.PRNGKey(0)
    kx, k1, k2, k3, k4, k5, k6 = jax.random.split(key, 7)

    # deterministic "checkpoint" (HWIO conv weights)
    w1 = jax.random.normal(k1, (3, 3, C_IN, C_MID), jnp.float32) * 0.1
    b1 = jax.random.normal(k2, (C_MID,), jnp.float32) * 0.1
    w2 = jax.random.normal(k3, (3, 3, C_MID, C_MID), jnp.float32) * 0.1
    b2 = jax.random.normal(k4, (C_MID,), jnp.float32) * 0.1
    fcw = jax.random.normal(k5, (C_MID, N_CLASSES), jnp.float32) * 0.1
    fcb = jax.random.normal(k6, (N_CLASSES,), jnp.float32) * 0.1
    params = (w1, b1, w2, b2, fcw, fcb)

    x = jax.random.normal(kx, (B, C_IN, H, W), jnp.float32)   # NCHW like PyTorch

    fwd = jax.jit(forward_pallas)
    out = jax.block_until_ready(fwd(x, params))
    ref = jax.block_until_ready(forward_ref(x, params))

    assert out.shape == (B, N_CLASSES)
    assert jnp.allclose(out, ref, atol=1e-4, rtol=1e-4), (out, ref)
    print("KERNEL_OK")
</pallas_src>

<mosaic_0001>
module attributes {stable_mosaic.version = 11 : i64} {
  func.func @fused_forward_kernel(%arg0: memref<8x546xf32, #tpu.memory_space<vmem>>, %arg1: memref<8x72xf32, #tpu.memory_space<vmem>>, %arg2: memref<8x1xf32, #tpu.memory_space<vmem>>, %arg3: memref<8x72xf32, #tpu.memory_space<vmem>>, %arg4: memref<8x1xf32, #tpu.memory_space<vmem>>, %arg5: memref<10x8xf32, #tpu.memory_space<vmem>>, %arg6: memref<10x1xf32, #tpu.memory_space<vmem>>, %arg7: memref<512x2xf32, #tpu.memory_space<vmem>>, %arg8: memref<10x2xf32, #tpu.memory_space<vmem>>, %arg9: memref<8x546xf32, #tpu.memory_space<vmem>>) attributes {dimension_semantics = [], scalar_prefetch = 0 : i64, scratch_operands = 1 : i64, tpu.core_type = #tpu.core_type<tc>} {
    %0 = tpu.iota {dimensions = array<i32: 1>} : vector<1x512xi32>
    %c15_i32 = arith.constant 15 : i32
    %1 = vector.broadcast %c15_i32 : i32 to vector<1x512xi32>
    %2 = arith.andi %0, %1 : vector<1x512xi32>
    %c4_i32 = arith.constant 4 : i32
    %3 = vector.broadcast %c4_i32 : i32 to vector<1x512xi32>
    %4 = arith.shrsi %0, %3 : vector<1x512xi32>
    %c15_i32_0 = arith.constant 15 : i32
    %5 = vector.broadcast %c15_i32_0 : i32 to vector<1x512xi32>
    %6 = arith.andi %4, %5 : vector<1x512xi32>
    %c-1_i32 = arith.constant -1 : i32
    %7 = vector.broadcast %c-1_i32 : i32 to vector<1x512xi32>
    %8 = arith.addi %6, %7 : vector<1x512xi32>
    %c0_i32 = arith.constant 0 : i32
    %9 = vector.broadcast %c0_i32 : i32 to vector<1x512xi32>
    %10 = arith.cmpi sge, %8, %9 : vector<1x512xi32>
    %c-1_i32_1 = arith.constant -1 : i32
    %11 = vector.broadcast %c-1_i32_1 : i32 to vector<1x512xi32>
    %12 = arith.addi %6, %11 : vector<1x512xi32>
    %c16_i32 = arith.constant 16 : i32
    %13 = vector.broadcast %c16_i32 : i32 to vector<1x512xi32>
    %14 = arith.cmpi slt, %12, %13 : vector<1x512xi32>
    %15 = arith.andi %10, %14 : vector<1x512xi1>
    %c-1_i32_2 = arith.constant -1 : i32
    %16 = vector.broadcast %c-1_i32_2 : i32 to vector<1x512xi32>
    %17 = arith.addi %2, %16 : vector<1x512xi32>
    %c0_i32_3 = arith.constant 0 : i32
    %18 = vector.broadcast %c0_i32_3 : i32 to vector<1x512xi32>
    %19 = arith.cmpi sge, %17, %18 : vector<1x512xi32>
    %20 = arith.andi %15, %19 : vector<1x512xi1>
    %c-1_i32_4 = arith.constant -1 : i32
    %21 = vector.broadcast %c-1_i32_4 : i32 to vector<1x512xi32>
    %22 = arith.addi %2, %21 : vector<1x512xi32>
    %c16_i32_5 = arith.constant 16 : i32
    %23 = vector.broadcast %c16_i32_5 : i32 to vector<1x512xi32>
    %24 = arith.cmpi slt, %22, %23 : vector<1x512xi32>
    %25 = arith.andi %20, %24 : vector<1x512xi1>
    %cst = arith.constant 1.000000e+00 : f32
    %cst_6 = arith.constant 0.000000e+00 : f32
    %26 = vector.broadcast %cst : f32 to vector<1x512xf32>
    %27 = vector.broadcast %cst_6 : f32 to vector<1x512xf32>
    %28 = arith.select %25, %26, %27 : vector<1x512xi1>, vector<1x512xf32>
    %c-1_i32_7 = arith.constant -1 : i32
    %29 = vector.broadcast %c-1_i32_7 : i32 to vector<1x512xi32>
    %30 = arith.addi %6, %29 : vector<1x512xi32>
    %c0_i32_8 = arith.constant 0 : i32
    %31 = vector.broadcast %c0_i32_8 : i32 to vector<1x512xi32>
    %32 = arith.cmpi sge, %30, %31 : vector<1x512xi32>
    %c-1_i32_9 = arith.constant -1 : i32
    %33 = vector.broadcast %c-1_i32_9 : i32 to vector<1x512xi32>
    %34 = arith.addi %6, %33 : vector<1x512xi32>
    %c16_i32_10 = arith.constant 16 : i32
    %35 = vector.broadcast %c16_i32_10 : i32 to vector<1x512xi32>
    %36 = arith.cmpi slt, %34, %35 : vector<1x512xi32>
    %37 = arith.andi %32, %36 : vector<1x512xi1>
    %c0_i32_11 = arith.constant 0 : i32
    %38 = vector.broadcast %c0_i32_11 : i32 to vector<1x512xi32>
    %39 = arith.addi %2, %38 : vector<1x512xi32>
    %c0_i32_12 = arith.constant 0 : i32
    %40 = vector.broadcast %c0_i32_12 : i32 to vector<1x512xi32>
    %41 = arith.cmpi sge, %39, %40 : vector<1x512xi32>
    %42 = arith.andi %37, %41 : vector<1x512xi1>
    %c0_i32_13 = arith.constant 0 : i32
    %43 = vector.broadcast %c0_i32_13 : i32 to vector<1x512xi32>
    %44 = arith.addi %2, %43 : vector<1x512xi32>
    %c16_i32_14 = arith.constant 16 : i32
    %45 = vector.broadcast %c16_i32_14 : i32 to vector<1x512xi32>
    %46 = arith.cmpi slt, %44, %45 : vector<1x512xi32>
    %47 = arith.andi %42, %46 : vector<1x512xi1>
    %cst_15 = arith.constant 1.000000e+00 : f32
    %cst_16 = arith.constant 0.000000e+00 : f32
    %48 = vector.broadcast %cst_15 : f32 to vector<1x512xf32>
    %49 = vector.broadcast %cst_16 : f32 to vector<1x512xf32>
    %50 = arith.select %47, %48, %49 : vector<1x512xi1>, vector<1x512xf32>
    %c-1_i32_17 = arith.constant -1 : i32
    %51 = vector.broadcast %c-1_i32_17 : i32 to vector<1x512xi32>
    %52 = arith.addi %6, %51 : vector<1x512xi32>
    %c0_i32_18 = arith.constant 0 : i32
    %53 = vector.broadcast %c0_i32_18 : i32 to vector<1x512xi32>
    %54 = arith.cmpi sge, %52, %53 : vector<1x512xi32>
    %c-1_i32_19 = arith.constant -1 : i32
    %55 = vector.broadcast %c-1_i32_19 : i32 to vector<1x512xi32>
    %56 = arith.addi %6, %55 : vector<1x512xi32>
    %c16_i32_20 = arith.constant 16 : i32
    %57 = vector.broadcast %c16_i32_20 : i32 to vector<1x512xi32>
    %58 = arith.cmpi slt, %56, %57 : vector<1x512xi32>
    %59 = arith.andi %54, %58 : vector<1x512xi1>
    %c1_i32 = arith.constant 1 : i32
    %60 = vector.broadcast %c1_i32 : i32 to vector<1x512xi32>
    %61 = arith.addi %2, %60 : vector<1x512xi32>
    %c0_i32_21 = arith.constant 0 : i32
    %62 = vector.broadcast %c0_i32_21 : i32 to vector<1x512xi32>
    %63 = arith.cmpi sge, %61, %62 : vector<1x512xi32>
    %64 = arith.andi %59, %63 : vector<1x512xi1>
    %c1_i32_22 = arith.constant 1 : i32
    %65 = vector.broadcast %c1_i32_22 : i32 to vector<1x512xi32>
    %66 = arith.addi %2, %65 : vector<1x512xi32>
    %c16_i32_23 = arith.constant 16 : i32
    %67 = vector.broadcast %c16_i32_23 : i32 to vector<1x512xi32>
    %68 = arith.cmpi slt, %66, %67 : vector<1x512xi32>
    %69 = arith.andi %64, %68 : vector<1x512xi1>
    %cst_24 = arith.constant 1.000000e+00 : f32
    %cst_25 = arith.constant 0.000000e+00 : f32
    %70 = vector.broadcast %cst_24 : f32 to vector<1x512xf32>
    %71 = vector.broadcast %cst_25 : f32 to vector<1x512xf32>
    %72 = arith.select %69, %70, %71 : vector<1x512xi1>, vector<1x512xf32>
    %c0_i32_26 = arith.constant 0 : i32
    %73 = vector.broadcast %c0_i32_26 : i32 to vector<1x512xi32>
    %74 = arith.addi %6, %73 : vector<1x512xi32>
    %c0_i32_27 = arith.constant 0 : i32
    %75 = vector.broadcast %c0_i32_27 : i32 to vector<1x512xi32>
    %76 = arith.cmpi sge, %74, %75 : vector<1x512xi32>
    %c0_i32_28 = arith.constant 0 : i32
    %77 = vector.broadcast %c0_i32_28 : i32 to vector<1x512xi32>
    %78 = arith.addi %6, %77 : vector<1x512xi32>
    %c16_i32_29 = arith.constant 16 : i32
    %79 = vector.broadcast %c16_i32_29 : i32 to vector<1x512xi32>
    %80 = arith.cmpi slt, %78, %79 : vector<1x512xi32>
    %81 = arith.andi %76, %80 : vector<1x512xi1>
    %c-1_i32_30 = arith.constant -1 : i32
    %82 = vector.broadcast %c-1_i32_30 : i32 to vector<1x512xi32>
    %83 = arith.addi %2, %82 : vector<1x512xi32>
    %c0_i32_31 = arith.constant 0 : i32
    %84 = vector.broadcast %c0_i32_31 : i32 to vector<1x512xi32>
    %85 = arith.cmpi sge, %83, %84 : vector<1x512xi32>
    %86 = arith.andi %81, %85 : vector<1x512xi1>
    %c-1_i32_32 = arith.constant -1 : i32
    %87 = vector.broadcast %c-1_i32_32 : i32 to vector<1x512xi32>
    %88 = arith.addi %2, %87 : vector<1x512xi32>
    %c16_i32_33 = arith.constant 16 : i32
    %89 = vector.broadcast %c16_i32_33 : i32 to vector<1x512xi32>
    %90 = arith.cmpi slt, %88, %89 : vector<1x512xi32>
    %91 = arith.andi %86, %90 : vector<1x512xi1>
    %cst_34 = arith.constant 1.000000e+00 : f32
    %cst_35 = arith.constant 0.000000e+00 : f32
    %92 = vector.broadcast %cst_34 : f32 to vector<1x512xf32>
    %93 = vector.broadcast %cst_35 : f32 to vector<1x512xf32>
    %94 = arith.select %91, %92, %93 : vector<1x512xi1>, vector<1x512xf32>
    %c0_i32_36 = arith.constant 0 : i32
    %95 = vector.broadcast %c0_i32_36 : i32 to vector<1x512xi32>
    %96 = arith.addi %6, %95 : vector<1x512xi32>
    %c0_i32_37 = arith.constant 0 : i32
    %97 = vector.broadcast %c0_i32_37 : i32 to vector<1x512xi32>
    %98 = arith.cmpi sge, %96, %97 : vector<1x512xi32>
    %c0_i32_38 = arith.constant 0 : i32
    %99 = vector.broadcast %c0_i32_38 : i32 to vector<1x512xi32>
    %100 = arith.addi %6, %99 : vector<1x512xi32>
    %c16_i32_39 = arith.constant 16 : i32
    %101 = vector.broadcast %c16_i32_39 : i32 to vector<1x512xi32>
    %102 = arith.cmpi slt, %100, %101 : vector<1x512xi32>
    %103 = arith.andi %98, %102 : vector<1x512xi1>
    %c0_i32_40 = arith.constant 0 : i32
    %104 = vector.broadcast %c0_i32_40 : i32 to vector<1x512xi32>
    %105 = arith.addi %2, %104 : vector<1x512xi32>
    %c0_i32_41 = arith.constant 0 : i32
    %106 = vector.broadcast %c0_i32_41 : i32 to vector<1x512xi32>
    %107 = arith.cmpi sge, %105, %106 : vector<1x512xi32>
    %108 = arith.andi %103, %107 : vector<1x512xi1>
    %c0_i32_42 = arith.constant 0 : i32
    %109 = vector.broadcast %c0_i32_42 : i32 to vector<1x512xi32>
    %110 = arith.addi %2, %109 : vector<1x512xi32>
    %c16_i32_43 = arith.constant 16 : i32
    %111 = vector.broadcast %c16_i32_43 : i32 to vector<1x512xi32>
    %112 = arith.cmpi slt, %110, %111 : vector<1x512xi32>
    %113 = arith.andi %108, %112 : vector<1x512xi1>
    %cst_44 = arith.constant 1.000000e+00 : f32
    %cst_45 = arith.constant 0.000000e+00 : f32
    %114 = vector.broadcast %cst_44 : f32 to vector<1x512xf32>
    %115 = vector.broadcast %cst_45 : f32 to vector<1x512xf32>
    %116 = arith.select %113, %114, %115 : vector<1x512xi1>, vector<1x512xf32>
    %c0_i32_46 = arith.constant 0 : i32
    %117 = vector.broadcast %c0_i32_46 : i32 to vector<1x512xi32>
    %118 = arith.addi %6, %117 : vector<1x512xi32>
    %c0_i32_47 = arith.constant 0 : i32
    %119 = vector.broadcast %c0_i32_47 : i32 to vector<1x512xi32>
    %120 = arith.cmpi sge, %118, %119 : vector<1x512xi32>
    %c0_i32_48 = arith.constant 0 : i32
    %121 = vector.broadcast %c0_i32_48 : i32 to vector<1x512xi32>
    %122 = arith.addi %6, %121 : vector<1x512xi32>
    %c16_i32_49 = arith.constant 16 : i32
    %123 = vector.broadcast %c16_i32_49 : i32 to vector<1x512xi32>
    %124 = arith.cmpi slt, %122, %123 : vector<1x512xi32>
    %125 = arith.andi %120, %124 : vector<1x512xi1>
    %c1_i32_50 = arith.constant 1 : i32
    %126 = vector.broadcast %c1_i32_50 : i32 to vector<1x512xi32>
    %127 = arith.addi %2, %126 : vector<1x512xi32>
    %c0_i32_51 = arith.constant 0 : i32
    %128 = vector.broadcast %c0_i32_51 : i32 to vector<1x512xi32>
    %129 = arith.cmpi sge, %127, %128 : vector<1x512xi32>
    %130 = arith.andi %125, %129 : vector<1x512xi1>
    %c1_i32_52 = arith.constant 1 : i32
    %131 = vector.broadcast %c1_i32_52 : i32 to vector<1x512xi32>
    %132 = arith.addi %2, %131 : vector<1x512xi32>
    %c16_i32_53 = arith.constant 16 : i32
    %133 = vector.broadcast %c16_i32_53 : i32 to vector<1x512xi32>
    %134 = arith.cmpi slt, %132, %133 : vector<1x512xi32>
    %135 = arith.andi %130, %134 : vector<1x512xi1>
    %cst_54 = arith.constant 1.000000e+00 : f32
    %cst_55 = arith.constant 0.000000e+00 : f32
    %136 = vector.broadcast %cst_54 : f32 to vector<1x512xf32>
    %137 = vector.broadcast %cst_55 : f32 to vector<1x512xf32>
    %138 = arith.select %135, %136, %137 : vector<1x512xi1>, vector<1x512xf32>
    %c1_i32_56 = arith.constant 1 : i32
    %139 = vector.broadcast %c1_i32_56 : i32 to vector<1x512xi32>
    %140 = arith.addi %6, %139 : vector<1x512xi32>
    %c0_i32_57 = arith.constant 0 : i32
    %141 = vector.broadcast %c0_i32_57 : i32 to vector<1x512xi32>
    %142 = arith.cmpi sge, %140, %141 : vector<1x512xi32>
    %c1_i32_58 = arith.constant 1 : i32
    %143 = vector.broadcast %c1_i32_58 : i32 to vector<1x512xi32>
    %144 = arith.addi %6, %143 : vector<1x512xi32>
    %c16_i32_59 = arith.constant 16 : i32
    %145 = vector.broadcast %c16_i32_59 : i32 to vector<1x512xi32>
    %146 = arith.cmpi slt, %144, %145 : vector<1x512xi32>
    %147 = arith.andi %142, %146 : vector<1x512xi1>
    %c-1_i32_60 = arith.constant -1 : i32
    %148 = vector.broadcast %c-1_i32_60 : i32 to vector<1x512xi32>
    %149 = arith.addi %2, %148 : vector<1x512xi32>
    %c0_i32_61 = arith.constant 0 : i32
    %150 = vector.broadcast %c0_i32_61 : i32 to vector<1x512xi32>
    %151 = arith.cmpi sge, %149, %150 : vector<1x512xi32>
    %152 = arith.andi %147, %151 : vector<1x512xi1>
    %c-1_i32_62 = arith.constant -1 : i32
    %153 = vector.broadcast %c-1_i32_62 : i32 to vector<1x512xi32>
    %154 = arith.addi %2, %153 : vector<1x512xi32>
    %c16_i32_63 = arith.constant 16 : i32
    %155 = vector.broadcast %c16_i32_63 : i32 to vector<1x512xi32>
    %156 = arith.cmpi slt, %154, %155 : vector<1x512xi32>
    %157 = arith.andi %152, %156 : vector<1x512xi1>
    %cst_64 = arith.constant 1.000000e+00 : f32
    %cst_65 = arith.constant 0.000000e+00 : f32
    %158 = vector.broadcast %cst_64 : f32 to vector<1x512xf32>
    %159 = vector.broadcast %cst_65 : f32 to vector<1x512xf32>
    %160 = arith.select %157, %158, %159 : vector<1x512xi1>, vector<1x512xf32>
    %c1_i32_66 = arith.constant 1 : i32
    %161 = vector.broadcast %c1_i32_66 : i32 to vector<1x512xi32>
    %162 = arith.addi %6, %161 : vector<1x512xi32>
    %c0_i32_67 = arith.constant 0 : i32
    %163 = vector.broadcast %c0_i32_67 : i32 to vector<1x512xi32>
    %164 = arith.cmpi sge, %162, %163 : vector<1x512xi32>
    %c1_i32_68 = arith.constant 1 : i32
    %165 = vector.broadcast %c1_i32_68 : i32 to vector<1x512xi32>
    %166 = arith.addi %6, %165 : vector<1x512xi32>
    %c16_i32_69 = arith.constant 16 : i32
    %167 = vector.broadcast %c16_i32_69 : i32 to vector<1x512xi32>
    %168 = arith.cmpi slt, %166, %167 : vector<1x512xi32>
    %169 = arith.andi %164, %168 : vector<1x512xi1>
    %c0_i32_70 = arith.constant 0 : i32
    %170 = vector.broadcast %c0_i32_70 : i32 to vector<1x512xi32>
    %171 = arith.addi %2, %170 : vector<1x512xi32>
    %c0_i32_71 = arith.constant 0 : i32
    %172 = vector.broadcast %c0_i32_71 : i32 to vector<1x512xi32>
    %173 = arith.cmpi sge, %171, %172 : vector<1x512xi32>
    %174 = arith.andi %169, %173 : vector<1x512xi1>
    %c0_i32_72 = arith.constant 0 : i32
    %175 = vector.broadcast %c0_i32_72 : i32 to vector<1x512xi32>
    %176 = arith.addi %2, %175 : vector<1x512xi32>
    %c16_i32_73 = arith.constant 16 : i32
    %177 = vector.broadcast %c16_i32_73 : i32 to vector<1x512xi32>
    %178 = arith.cmpi slt, %176, %177 : vector<1x512xi32>
    %179 = arith.andi %174, %178 : vector<1x512xi1>
    %cst_74 = arith.constant 1.000000e+00 : f32
    %cst_75 = arith.constant 0.000000e+00 : f32
    %180 = vector.broadcast %cst_74 : f32 to vector<1x512xf32>
    %181 = vector.broadcast %cst_75 : f32 to vector<1x512xf32>
    %182 = arith.select %179, %180, %181 : vector<1x512xi1>, vector<1x512xf32>
    %c1_i32_76 = arith.constant 1 : i32
    %183 = vector.broadcast %c1_i32_76 : i32 to vector<1x512xi32>
    %184 = arith.addi %6, %183 : vector<1x512xi32>
    %c0_i32_77 = arith.constant 0 : i32
    %185 = vector.broadcast %c0_i32_77 : i32 to vector<1x512xi32>
    %186 = arith.cmpi sge, %184, %185 : vector<1x512xi32>
    %c1_i32_78 = arith.constant 1 : i32
    %187 = vector.broadcast %c1_i32_78 : i32 to vector<1x512xi32>
    %188 = arith.addi %6, %187 : vector<1x512xi32>
    %c16_i32_79 = arith.constant 16 : i32
    %189 = vector.broadcast %c16_i32_79 : i32 to vector<1x512xi32>
    %190 = arith.cmpi slt, %188, %189 : vector<1x512xi32>
    %191 = arith.andi %186, %190 : vector<1x512xi1>
    %c1_i32_80 = arith.constant 1 : i32
    %192 = vector.broadcast %c1_i32_80 : i32 to vector<1x512xi32>
    %193 = arith.addi %2, %192 : vector<1x512xi32>
    %c0_i32_81 = arith.constant 0 : i32
    %194 = vector.broadcast %c0_i32_81 : i32 to vector<1x512xi32>
    %195 = arith.cmpi sge, %193, %194 : vector<1x512xi32>
    %196 = arith.andi %191, %195 : vector<1x512xi1>
    %c1_i32_82 = arith.constant 1 : i32
    %197 = vector.broadcast %c1_i32_82 : i32 to vector<1x512xi32>
    %198 = arith.addi %2, %197 : vector<1x512xi32>
    %c16_i32_83 = arith.constant 16 : i32
    %199 = vector.broadcast %c16_i32_83 : i32 to vector<1x512xi32>
    %200 = arith.cmpi slt, %198, %199 : vector<1x512xi32>
    %201 = arith.andi %196, %200 : vector<1x512xi1>
    %cst_84 = arith.constant 1.000000e+00 : f32
    %cst_85 = arith.constant 0.000000e+00 : f32
    %202 = vector.broadcast %cst_84 : f32 to vector<1x512xf32>
    %203 = vector.broadcast %cst_85 : f32 to vector<1x512xf32>
    %204 = arith.select %201, %202, %203 : vector<1x512xi1>, vector<1x512xf32>
    %c0 = arith.constant 0 : index
    %c0_86 = arith.constant 0 : index
    %205 = vector.load %arg0[%c0, %c0_86] : memref<8x546xf32, #tpu.memory_space<vmem>>, vector<8x512xf32>
    %206 = vector.broadcast %28 : vector<1x512xf32> to vector<8x512xf32>
    %207 = arith.mulf %205, %206 : vector<8x512xf32>
    %c0_87 = arith.constant 0 : index
    %c1 = arith.constant 1 : index
    %208 = vector.load %arg0[%c0_87, %c1] : memref<8x546xf32, #tpu.memory_space<vmem>>, vector<8x512xf32>
    %209 = vector.broadcast %50 : vector<1x512xf32> to vector<8x512xf32>
    %210 = arith.mulf %208, %209 : vector<8x512xf32>
    %c0_88 = arith.constant 0 : index
    %c2 = arith.constant 2 : index
    %211 = vector.load %arg0[%c0_88, %c2] : memref<8x546xf32, #tpu.memory_space<vmem>>, vector<8x512xf32>
    %212 = vector.broadcast %72 : vector<1x512xf32> to vector<8x512xf32>
    %213 = arith.mulf %211, %212 : vector<8x512xf32>
    %c0_89 = arith.constant 0 : index
    %c16 = arith.constant 16 : index
    %214 = vector.load %arg0[%c0_89, %c16] : memref<8x546xf32, #tpu.memory_space<vmem>>, vector<8x512xf32>
    %215 = vector.broadcast %94 : vector<1x512xf32> to vector<8x512xf32>
    %216 = arith.mulf %214, %215 : vector<8x512xf32>
    %c0_90 = arith.constant 0 : index
    %c17 = arith.constant 17 : index
    %217 = vector.load %arg0[%c0_90, %c17] : memref<8x546xf32, #tpu.memory_space<vmem>>, vector<8x512xf32>
    %218 = vector.broadcast %116 : vector<1x512xf32> to vector<8x512xf32>
    %219 = arith.mulf %217, %218 : vector<8x512xf32>
    %c0_91 = arith.constant 0 : index
    %c18 = arith.constant 18 : index
    %220 = vector.load %arg0[%c0_91, %c18] : memref<8x546xf32, #tpu.memory_space<vmem>>, vector<8x512xf32>
    %221 = vector.broadcast %138 : vector<1x512xf32> to vector<8x512xf32>
    %222 = arith.mulf %220, %221 : vector<8x512xf32>
    %c0_92 = arith.constant 0 : index
    %c32 = arith.constant 32 : index
    %223 = vector.load %arg0[%c0_92, %c32] : memref<8x546xf32, #tpu.memory_space<vmem>>, vector<8x512xf32>
    %224 = vector.broadcast %160 : vector<1x512xf32> to vector<8x512xf32>
    %225 = arith.mulf %223, %224 : vector<8x512xf32>
    %c0_93 = arith.constant 0 : index
    %c33 = arith.constant 33 : index
    %226 = vector.load %arg0[%c0_93, %c33] : memref<8x546xf32, #tpu.memory_space<vmem>>, vector<8x512xf32>
    %227 = vector.broadcast %182 : vector<1x512xf32> to vector<8x512xf32>
    %228 = arith.mulf %226, %227 : vector<8x512xf32>
    %c0_94 = arith.constant 0 : index
    %c34 = arith.constant 34 : index
    %229 = vector.load %arg0[%c0_94, %c34] : memref<8x546xf32, #tpu.memory_space<vmem>>, vector<8x512xf32>
    %230 = vector.broadcast %204 : vector<1x512xf32> to vector<8x512xf32>
    %231 = arith.mulf %229, %230 : vector<8x512xf32>
    %232 = tpu.concatenate %207, %210, %213, %216, %219, %222, %225, %228, %231 in 0 : vector<8x512xf32>, vector<8x512xf32>, vector<8x512xf32>, vector<8x512xf32>, vector<8x512xf32>, vector<8x512xf32>, vector<8x512xf32>, vector<8x512xf32>, vector<8x512xf32> -> vector<72x512xf32>
    %c0_95 = arith.constant 0 : index
    %c0_96 = arith.constant 0 : index
    %233 = vector.load %arg1[%c0_95, %c0_96] : memref<8x72xf32, #tpu.memory_space<vmem>>, vector<8x72xf32>
    %cst_97 = arith.constant dense<0.000000e+00> : vector<8x512xf32>
    %234 = tpu.matmul %233, %232, %cst_97 {dimension_numbers = #tpu.dot_dimension_numbers<[1], [0], [0], [1], [0, 0, 1, 1], [], []>} : vector<8x72xf32>, vector<72x512xf32>, vector<8x512xf32> -> vector<8x512xf32>
    %c0_98 = arith.constant 0 : index
    %c0_99 = arith.constant 0 : index
    %235 = vector.load %arg2[%c0_98, %c0_99] : memref<8x1xf32, #tpu.memory_space<vmem>>, vector<8x1xf32>
    %236 = vector.broadcast %235 : vector<8x1xf32> to vector<8x512xf32>
    %237 = arith.addf %234, %236 : vector<8x512xf32>
    %cst_100 = arith.constant 0.000000e+00 : f32
    %238 = vector.broadcast %cst_100 : f32 to vector<8x512xf32>
    %239 = arith.maximumf %237, %238 : vector<8x512xf32>
    %cst_101 = arith.constant 0.000000e+00 : f32
    %240 = vector.broadcast %cst_101 : f32 to vector<8x546xf32>
    %c0_102 = arith.constant 0 : index
    %c0_103 = arith.constant 0 : index
    %241 = vector.load %arg9[%c0_102, %c0_103] : memref<8x546xf32, #tpu.memory_space<vmem>>, vector<8x546xf32>
    tpu.vector_store %arg9[%c0_102, %c0_103], %240 {strides = array<i32>} : memref<8x546xf32, #tpu.memory_space<vmem>>, vector<8x546xf32>,
    %c0_104 = arith.constant 0 : index
    %c17_105 = arith.constant 17 : index
    %242 = vector.load %arg9[%c0_104, %c17_105] : memref<8x546xf32, #tpu.memory_space<vmem>>, vector<8x512xf32>
    tpu.vector_store %arg9[%c0_104, %c17_105], %239 {strides = array<i32>} : memref<8x546xf32, #tpu.memory_space<vmem>>, vector<8x512xf32>,
    %c0_106 = arith.constant 0 : index
    %c0_107 = arith.constant 0 : index
    %243 = vector.load %arg9[%c0_106, %c0_107] : memref<8x546xf32, #tpu.memory_space<vmem>>, vector<8x512xf32>
    %244 = vector.broadcast %28 : vector<1x512xf32> to vector<8x512xf32>
    %245 = arith.mulf %243, %244 : vector<8x512xf32>
    %c0_108 = arith.constant 0 : index
    %c1_109 = arith.constant 1 : index
    %246 = vector.load %arg9[%c0_108, %c1_109] : memref<8x546xf32, #tpu.memory_space<vmem>>, vector<8x512xf32>
    %247 = vector.broadcast %50 : vector<1x512xf32> to vector<8x512xf32>
    %248 = arith.mulf %246, %247 : vector<8x512xf32>
    %c0_110 = arith.constant 0 : index
    %c2_111 = arith.constant 2 : index
    %249 = vector.load %arg9[%c0_110, %c2_111] : memref<8x546xf32, #tpu.memory_space<vmem>>, vector<8x512xf32>
    %250 = vector.broadcast %72 : vector<1x512xf32> to vector<8x512xf32>
    %251 = arith.mulf %249, %250 : vector<8x512xf32>
    %c0_112 = arith.constant 0 : index
    %c16_113 = arith.constant 16 : index
    %252 = vector.load %arg9[%c0_112, %c16_113] : memref<8x546xf32, #tpu.memory_space<vmem>>, vector<8x512xf32>
    %253 = vector.broadcast %94 : vector<1x512xf32> to vector<8x512xf32>
    %254 = arith.mulf %252, %253 : vector<8x512xf32>
    %c0_114 = arith.constant 0 : index
    %c17_115 = arith.constant 17 : index
    %255 = vector.load %arg9[%c0_114, %c17_115] : memref<8x546xf32, #tpu.memory_space<vmem>>, vector<8x512xf32>
    %256 = vector.broadcast %116 : vector<1x512xf32> to vector<8x512xf32>
    %257 = arith.mulf %255, %256 : vector<8x512xf32>
    %c0_116 = arith.constant 0 : index
    %c18_117 = arith.constant 18 : index
    %258 = vector.load %arg9[%c0_116, %c18_117] : memref<8x546xf32, #tpu.memory_space<vmem>>, vector<8x512xf32>
    %259 = vector.broadcast %138 : vector<1x512xf32> to vector<8x512xf32>
    %260 = arith.mulf %258, %259 : vector<8x512xf32>
    %c0_118 = arith.constant 0 : index
    %c32_119 = arith.constant 32 : index
    %261 = vector.load %arg9[%c0_118, %c32_119] : memref<8x546xf32, #tpu.memory_space<vmem>>, vector<8x512xf32>
    %262 = vector.broadcast %160 : vector<1x512xf32> to vector<8x512xf32>
    %263 = arith.mulf %261, %262 : vector<8x512xf32>
    %c0_120 = arith.constant 0 : index
    %c33_121 = arith.constant 33 : index
    %264 = vector.load %arg9[%c0_120, %c33_121] : memref<8x546xf32, #tpu.memory_space<vmem>>, vector<8x512xf32>
    %265 = vector.broadcast %182 : vector<1x512xf32> to vector<8x512xf32>
    %266 = arith.mulf %264, %265 : vector<8x512xf32>
    %c0_122 = arith.constant 0 : index
    %c34_123 = arith.constant 34 : index
    %267 = vector.load %arg9[%c0_122, %c34_123] : memref<8x546xf32, #tpu.memory_space<vmem>>, vector<8x512xf32>
    %268 = vector.broadcast %204 : vector<1x512xf32> to vector<8x512xf32>
    %269 = arith.mulf %267, %268 : vector<8x512xf32>
    %270 = tpu.concatenate %245, %248, %251, %254, %257, %260, %263, %266, %269 in 0 : vector<8x512xf32>, vector<8x512xf32>, vector<8x512xf32>, vector<8x512xf32>, vector<8x512xf32>, vector<8x512xf32>, vector<8x512xf32>, vector<8x512xf32>, vector<8x512xf32> -> vector<72x512xf32>
    %c0_124 = arith.constant 0 : index
    %c0_125 = arith.constant 0 : index
    %271 = vector.load %arg3[%c0_124, %c0_125] : memref<8x72xf32, #tpu.memory_space<vmem>>, vector<8x72xf32>
    %cst_126 = arith.constant dense<0.000000e+00> : vector<8x512xf32>
    %272 = tpu.matmul %271, %270, %cst_126 {dimension_numbers = #tpu.dot_dimension_numbers<[1], [0], [0], [1], [0, 0, 1, 1], [], []>} : vector<8x72xf32>, vector<72x512xf32>, vector<8x512xf32> -> vector<8x512xf32>
    %c0_127 = arith.constant 0 : index
    %c0_128 = arith.constant 0 : index
    %273 = vector.load %arg4[%c0_127, %c0_128] : memref<8x1xf32, #tpu.memory_space<vmem>>, vector<8x1xf32>
    %274 = vector.broadcast %273 : vector<8x1xf32> to vector<8x512xf32>
    %275 = arith.addf %272, %274 : vector<8x512xf32>
    %cst_129 = arith.constant 0.000000e+00 : f32
    %276 = vector.broadcast %cst_129 : f32 to vector<8x512xf32>
    %277 = arith.maximumf %275, %276 : vector<8x512xf32>
    %c0_130 = arith.constant 0 : index
    %c0_131 = arith.constant 0 : index
    %278 = vector.load %arg7[%c0_130, %c0_131] : memref<512x2xf32, #tpu.memory_space<vmem>>, vector<512x2xf32>
    %cst_132 = arith.constant dense<0.000000e+00> : vector<8x2xf32>
    %279 = tpu.matmul %277, %278, %cst_132 {dimension_numbers = #tpu.dot_dimension_numbers<[1], [0], [0], [1], [0, 0, 1, 1], [], []>} : vector<8x512xf32>, vector<512x2xf32>, vector<8x2xf32> -> vector<8x2xf32>
    %c0_133 = arith.constant 0 : index
    %c0_134 = arith.constant 0 : index
    %280 = vector.load %arg5[%c0_133, %c0_134] : memref<10x8xf32, #tpu.memory_space<vmem>>, vector<10x8xf32>
    %cst_135 = arith.constant dense<0.000000e+00> : vector<10x2xf32>
    %281 = tpu.matmul %280, %279, %cst_135 {dimension_numbers = #tpu.dot_dimension_numbers<[1], [0], [0], [1], [0, 0, 1, 1], [], []>} : vector<10x8xf32>, vector<8x2xf32>, vector<10x2xf32> -> vector<10x2xf32>
    %c0_136 = arith.constant 0 : index
    %c0_137 = arith.constant 0 : index
    %282 = vector.load %arg6[%c0_136, %c0_137] : memref<10x1xf32, #tpu.memory_space<vmem>>, vector<10x1xf32>
    %283 = vector.broadcast %282 : vector<10x1xf32> to vector<10x2xf32>
    %284 = arith.addf %281, %283 : vector<10x2xf32>
    %c0_138 = arith.constant 0 : index
    %c0_139 = arith.constant 0 : index
    %285 = vector.load %arg8[%c0_138, %c0_139] : memref<10x2xf32, #tpu.memory_space<vmem>>, vector<10x2xf32>
    tpu.vector_store %arg8[%c0_138, %c0_139], %284 {strides = array<i32>} : memref<10x2xf32, #tpu.memory_space<vmem>>, vector<10x2xf32>,
    return
  }
}

</mosaic_0001>

<llo_original>
// kernel: forward_pallas.1
$region0: #{forward_pallas.1}
  #allocation0 [shape = 'u32[]', space=smem, size = 0x4, offset = 0x4, fixed_abs, tag = 'smem constant byte address 0x4 - core index']
  #allocation1 [shape = 'u32[72,128]{1,0:T(1,128)}', space=vmem, size = 0x9000, scoped, tag = 'internal scratch']
  #allocation2 [shape = 'f32[8,546]{1,0:T(8,128)}', space=vmem, size = 0x5000, scoped, tag = 'scratch operand']
  %s0 = inlined_call_operand.vmem [shape: f32[8,546], index: 0, kind: input, shape index: {}]
  %s1 = inlined_call_operand.vmem [shape: f32[8,72], index: 1, kind: input, shape index: {}]
  %s2 = inlined_call_operand.vmem [shape: f32[8,1], index: 2, kind: input, shape index: {}]
  %s3 = inlined_call_operand.vmem [shape: f32[8,72], index: 3, kind: input, shape index: {}]
  %s4 = inlined_call_operand.vmem [shape: f32[8,1], index: 4, kind: input, shape index: {}]
  %s5 = inlined_call_operand.vmem [shape: f32[10,8], index: 5, kind: input, shape index: {}]
  %s6 = inlined_call_operand.vmem [shape: f32[10,1], index: 6, kind: input, shape index: {}]
  %s7 = inlined_call_operand.vmem [shape: f32[512,2], index: 7, kind: input, shape index: {}]
  %s8 = inlined_call_operand.vmem [shape: f32[10,2], index: 8, kind: output, shape index: {}]
  %s9 = sld [smem:[#allocation0]]
  $region42: #{forward_pallas.1} parent=0
    _
  %s11 = ssub.s32 1, %s9
  %s12 = scalar_select 0, %s11, %s9
  // Predicated region
  $region2: #{forward_pallas.1} parent=0 // pred_check
    _
  $region3: #{forward_pallas.1} parent=0 // pred_check_branch
    %14 = sbr.rel (0) target = $region5
  $region4: #{forward_pallas.1} parent=0 // pred_region
    _
  $region5: #{forward_pallas.1} parent=0 // pred_fallthru
    _
  // Predicated region
  $region6: #{forward_pallas.1} parent=0 // pred_check
    _
  $region7: #{forward_pallas.1} parent=0 // pred_check_branch
    %16 = sbr.rel (0) target = $region9
  $region8: #{forward_pallas.1} parent=0 // pred_region
    _
  $region9: #{forward_pallas.1} parent=0 // pred_fallthru
    _
  // Predicated region
  $region10: #{forward_pallas.1} parent=0 // pred_check
    _
  $region11: #{forward_pallas.1} parent=0 // pred_check_branch
    %18 = sbr.rel (0) target = $region13
  $region12: #{forward_pallas.1} parent=0 // pred_region
    _
  $region13: #{forward_pallas.1} parent=0 // pred_fallthru
    _
  // Predicated region
  $region14: #{forward_pallas.1} parent=0 // pred_check
    _
  $region15: #{forward_pallas.1} parent=0 // pred_check_branch
    %20 = sbr.rel (0) target = $region17
  $region16: #{forward_pallas.1} parent=0 // pred_region
    _
  $region17: #{forward_pallas.1} parent=0 // pred_fallthru
    _
  // Predicated region
  $region18: #{forward_pallas.1} parent=0 // pred_check
    _
  $region19: #{forward_pallas.1} parent=0 // pred_check_branch
    %22 = sbr.rel (0) target = $region21
  $region20: #{forward_pallas.1} parent=0 // pred_region
    _
  $region21: #{forward_pallas.1} parent=0 // pred_fallthru
    _
  // Predicated region
  $region22: #{forward_pallas.1} parent=0 // pred_check
    _
  $region23: #{forward_pallas.1} parent=0 // pred_check_branch
    %24 = sbr.rel (0) target = $region25
  $region24: #{forward_pallas.1} parent=0 // pred_region
    _
  $region25: #{forward_pallas.1} parent=0 // pred_fallthru
    _
  // Predicated region
  $region26: #{forward_pallas.1} parent=0 // pred_check
    _
  $region27: #{forward_pallas.1} parent=0 // pred_check_branch
    %26 = sbr.rel (0) target = $region29
  $region28: #{forward_pallas.1} parent=0 // pred_region
    _
  $region29: #{forward_pallas.1} parent=0 // pred_fallthru
    _
  // Predicated region
  $region30: #{forward_pallas.1} parent=0 // pred_check
    _
  $region31: #{forward_pallas.1} parent=0 // pred_check_branch
    %28 = sbr.rel (0) target = $region33
  $region32: #{forward_pallas.1} parent=0 // pred_region
    _
  $region33: #{forward_pallas.1} parent=0 // pred_fallthru
    _
  %v29 = vlaneseq
  %v30 = vand.u32 %v29, 127
  %v31 = vadd.s32 %v30, 128
  %v32 = vadd.s32 %v30, 256
  %v33 = vadd.s32 %v30, 384
  %v34 = vand.u32 %v30, 15
  %v35 = vand.u32 %v31, 15
  %v36 = vand.u32 %v32, 15
  %v37 = vand.u32 %v33, 15
  %v38 = vshra.s32 %v30, 4
  %v39 = vshra.s32 %v31, 4
  %v40 = vshra.s32 %v32, 4
  %v41 = vshra.s32 %v33, 4
  %v42 = vand.u32 %v38, 15
  %v43 = vand.u32 %v39, 15
  %v44 = vand.u32 %v40, 15
  %v45 = vand.u32 %v41, 15
  %v46 = vadd.s32 %v42, 4294967295
  %v47 = vadd.s32 %v43, 4294967295
  %v48 = vadd.s32 %v44, 4294967295
  %v49 = vadd.s32 %v45, 4294967295
  %vm50 = vcmp.ge.s32.totalorder %v46, 0
  %vm51 = vcmp.ge.s32.totalorder %v47, 0
  %vm52 = vcmp.ge.s32.totalorder %v48, 0
  %vm53 = vcmp.ge.s32.totalorder %v49, 0
  %vm54 = vcmp.lt.s32.totalorder %v46, 16
  %vm55 = vcmp.lt.s32.totalorder %v47, 16
  %vm56 = vcmp.lt.s32.totalorder %v48, 16
  %vm57 = vcmp.lt.s32.totalorder %v49, 16
  %vm58 = vmand %vm50, %vm54
  %vm59 = vmand %vm51, %vm55
  %vm60 = vmand %vm52, %vm56
  %vm61 = vmand %vm53, %vm57
  %v62 = vadd.s32 %v34, 4294967295
  %v63 = vadd.s32 %v35, 4294967295
  %v64 = vadd.s32 %v36, 4294967295
  %v65 = vadd.s32 %v37, 4294967295
  %vm66 = vcmp.ge.s32.totalorder %v62, 0
  %vm67 = vcmp.ge.s32.totalorder %v63, 0
  %vm68 = vcmp.ge.s32.totalorder %v64, 0
  %vm69 = vcmp.ge.s32.totalorder %v65, 0
  %vm70 = vmand %vm58, %vm66
  %vm71 = vmand %vm59, %vm67
  %vm72 = vmand %vm60, %vm68
  %vm73 = vmand %vm61, %vm69
  %vm74 = vcmp.lt.s32.totalorder %v62, 16
  %vm75 = vcmp.lt.s32.totalorder %v63, 16
  %vm76 = vcmp.lt.s32.totalorder %v64, 16
  %vm77 = vcmp.lt.s32.totalorder %v65, 16
  %vm78 = vmand %vm70, %vm74
  %vm79 = vmand %vm71, %vm75
  %vm80 = vmand %vm72, %vm76
  %vm81 = vmand %vm73, %vm77
  %v82 = vsel %vm78, 1.0, 0.0
  %v83 = vsel %vm79, 1.0, 0.0
  %v84 = vsel %vm80, 1.0, 0.0
  %v85 = vsel %vm81, 1.0, 0.0
  %vm86 = vcmp.ge.s32.totalorder %v34, 0
  %vm87 = vcmp.ge.s32.totalorder %v35, 0
  %vm88 = vcmp.ge.s32.totalorder %v36, 0
  %vm89 = vcmp.ge.s32.totalorder %v37, 0
  %vm90 = vmand %vm58, %vm86
  %vm91 = vmand %vm59, %vm87
  %vm92 = vmand %vm60, %vm88
  %vm93 = vmand %vm61, %vm89
  %vm94 = vcmp.lt.s32.totalorder %v34, 16
  %vm95 = vcmp.lt.s32.totalorder %v35, 16
  %vm96 = vcmp.lt.s32.totalorder %v36, 16
  %vm97 = vcmp.lt.s32.totalorder %v37, 16
  %vm98 = vmand %vm90, %vm94
  %vm99 = vmand %vm91, %vm95
  %vm100 = vmand %vm92, %vm96
  %vm101 = vmand %vm93, %vm97
  %v102 = vsel %vm98, 1.0, 0.0
  %v103 = vsel %vm99, 1.0, 0.0
  %v104 = vsel %vm100, 1.0, 0.0
  %v105 = vsel %vm101, 1.0, 0.0
  %v106 = vadd.s32 %v34, 1
  %v107 = vadd.s32 %v35, 1
  %v108 = vadd.s32 %v36, 1
  %v109 = vadd.s32 %v37, 1
  %vm110 = vcmp.ge.s32.totalorder %v106, 0
  %vm111 = vcmp.ge.s32.totalorder %v107, 0
  %vm112 = vcmp.ge.s32.totalorder %v108, 0
  %vm113 = vcmp.ge.s32.totalorder %v109, 0
  %vm114 = vmand %vm58, %vm110
  %vm115 = vmand %vm59, %vm111
  %vm116 = vmand %vm60, %vm112
  %vm117 = vmand %vm61, %vm113
  %vm118 = vcmp.lt.s32.totalorder %v106, 16
  %vm119 = vcmp.lt.s32.totalorder %v107, 16
  %vm120 = vcmp.lt.s32.totalorder %v108, 16
  %vm121 = vcmp.lt.s32.totalorder %v109, 16
  %vm122 = vmand %vm114, %vm118
  %vm123 = vmand %vm115, %vm119
  %vm124 = vmand %vm116, %vm120
  %vm125 = vmand %vm117, %vm121
  %v126 = vsel %vm122, 1.0, 0.0
  %v127 = vsel %vm123, 1.0, 0.0
  %v128 = vsel %vm124, 1.0, 0.0
  %v129 = vsel %vm125, 1.0, 0.0
  %vm130 = vcmp.ge.s32.totalorder %v42, 0
  %vm131 = vcmp.ge.s32.totalorder %v43, 0
  %vm132 = vcmp.ge.s32.totalorder %v44, 0
  %vm133 = vcmp.ge.s32.totalorder %v45, 0
  %vm134 = vcmp.lt.s32.totalorder %v42, 16
  %vm135 = vcmp.lt.s32.totalorder %v43, 16
  %vm136 = vcmp.lt.s32.totalorder %v44, 16
  %vm137 = vcmp.lt.s32.totalorder %v45, 16
  %vm138 = vmand %vm130, %vm134
  %vm139 = vmand %vm131, %vm135
  %vm140 = vmand %vm132, %vm136
  %vm141 = vmand %vm133, %vm137
  %vm142 = vmand %vm138, %vm66
  %vm143 = vmand %vm139, %vm67
  %vm144 = vmand %vm140, %vm68
  %vm145 = vmand %vm141, %vm69
  %vm146 = vmand %vm142, %vm74
  %vm147 = vmand %vm143, %vm75
  %vm148 = vmand %vm144, %vm76
  %vm149 = vmand %vm145, %vm77
  %v150 = vsel %vm146, 1.0, 0.0
  %v151 = vsel %vm147, 1.0, 0.0
  %v152 = vsel %vm148, 1.0, 0.0
  %v153 = vsel %vm149, 1.0, 0.0
  %vm154 = vmand %vm138, %vm86
  %vm155 = vmand %vm139, %vm87
  %vm156 = vmand %vm140, %vm88
  %vm157 = vmand %vm141, %vm89
  %vm158 = vmand %vm154, %vm94
  %vm159 = vmand %vm155, %vm95
  %vm160 = vmand %vm156, %vm96
  %vm161 = vmand %vm157, %vm97
  %v162 = vsel %vm158, 1.0, 0.0
  %v163 = vsel %vm159, 1.0, 0.0
  %v164 = vsel %vm160, 1.0, 0.0
  %v165 = vsel %vm161, 1.0, 0.0
  %vm166 = vmand %vm138, %vm110
  %vm167 = vmand %vm139, %vm111
  %vm168 = vmand %vm140, %vm112
  %vm169 = vmand %vm141, %vm113
  %vm170 = vmand %vm166, %vm118
  %vm171 = vmand %vm167, %vm119
  %vm172 = vmand %vm168, %vm120
  %vm173 = vmand %vm169, %vm121
  %v174 = vsel %vm170, 1.0, 0.0
  %v175 = vsel %vm171, 1.0, 0.0
  %v176 = vsel %vm172, 1.0, 0.0
  %v177 = vsel %vm173, 1.0, 0.0
  %v178 = vadd.s32 %v42, 1
  %v179 = vadd.s32 %v43, 1
  %v180 = vadd.s32 %v44, 1
  %v181 = vadd.s32 %v45, 1
  %vm182 = vcmp.ge.s32.totalorder %v178, 0
  %vm183 = vcmp.ge.s32.totalorder %v179, 0
  %vm184 = vcmp.ge.s32.totalorder %v180, 0
  %vm185 = vcmp.ge.s32.totalorder %v181, 0
  %vm186 = vcmp.lt.s32.totalorder %v178, 16
  %vm187 = vcmp.lt.s32.totalorder %v179, 16
  %vm188 = vcmp.lt.s32.totalorder %v180, 16
  %vm189 = vcmp.lt.s32.totalorder %v181, 16
  %vm190 = vmand %vm182, %vm186
  %vm191 = vmand %vm183, %vm187
  %vm192 = vmand %vm184, %vm188
  %vm193 = vmand %vm185, %vm189
  %vm194 = vmand %vm190, %vm66
  %vm195 = vmand %vm191, %vm67
  %vm196 = vmand %vm192, %vm68
  %vm197 = vmand %vm193, %vm69
  %vm198 = vmand %vm194, %vm74
  %vm199 = vmand %vm195, %vm75
  %vm200 = vmand %vm196, %vm76
  %vm201 = vmand %vm197, %vm77
  %v202 = vsel %vm198, 1.0, 0.0
  %v203 = vsel %vm199, 1.0, 0.0
  %v204 = vsel %vm200, 1.0, 0.0
  %v205 = vsel %vm201, 1.0, 0.0
  %vm206 = vmand %vm190, %vm86
  %vm207 = vmand %vm191, %vm87
  %vm208 = vmand %vm192, %vm88
  %vm209 = vmand %vm193, %vm89
  %vm210 = vmand %vm206, %vm94
  %vm211 = vmand %vm207, %vm95
  %vm212 = vmand %vm208, %vm96
  %vm213 = vmand %vm209, %vm97
  %v214 = vsel %vm210, 1.0, 0.0
  %v215 = vsel %vm211, 1.0, 0.0
  %v216 = vsel %vm212, 1.0, 0.0
  %v217 = vsel %vm213, 1.0, 0.0
  %vm218 = vmand %vm190, %vm110
  %vm219 = vmand %vm191, %vm111
  %vm220 = vmand %vm192, %vm112
  %vm221 = vmand %vm193, %vm113
  %vm222 = vmand %vm218, %vm118
  %vm223 = vmand %vm219, %vm119
  %vm224 = vmand %vm220, %vm120
  %vm225 = vmand %vm221, %vm121
  %v226 = vsel %vm222, 1.0, 0.0
  %v227 = vsel %vm223, 1.0, 0.0
  %v228 = vsel %vm224, 1.0, 0.0
  %v229 = vsel %vm225, 1.0, 0.0
  %v230 = vld [vmem:[%s0] sm:$0xff]
  %v231 = vld [vmem:[%s0 + $0x8] sm:$0xff]
  %v232 = vld [vmem:[%s0 + $0x10] sm:$0xff]
  %v233 = vld [vmem:[%s0 + $0x18] sm:$0xff]
  %v234 = vmul.f32 %v230, %v82
  %v235 = vmul.f32 %v231, %v83
  %v236 = vmul.f32 %v232, %v84
  %v237 = vmul.f32 %v233, %v85
  %v238 = vld [vmem:[%s0 + $0x20] sm:$0xff]
  %243 = vrot.lane.b32.xlu0 %v102, 1
  %v244 = vpop.permute.xlu0 %243
  %245 = vrot.lane.b32.xlu0 %v103, 1
  %v246 = vpop.permute.xlu0 %245
  %247 = vrot.lane.b32.xlu0 %v104, 1
  %v248 = vpop.permute.xlu0 %247
  %249 = vrot.lane.b32.xlu0 %v105, 1
  %v250 = vpop.permute.xlu0 %249
  %vm251 = vcmask 7168
  %v252 = vsel %vm251, %v244, %v246
  %v253 = vsel %vm251, %v246, %v248
  %v254 = vsel %vm251, %v248, %v250
  %v260 = vmul.f32 %v230, %v244
  %v261 = vmul.f32 %v231, %v252
  %v262 = vmul.f32 %v232, %v253
  %v263 = vmul.f32 %v233, %v254
  %v264 = vmul.f32 %v238, %v250
  %269 = vrot.lane.b32.xlu0 %v126, 2
  %v270 = vpop.permute.xlu0 %269
  %271 = vrot.lane.b32.xlu0 %v127, 2
  %v272 = vpop.permute.xlu0 %271
  %273 = vrot.lane.b32.xlu0 %v128, 2
  %v274 = vpop.permute.xlu0 %273
  %275 = vrot.lane.b32.xlu0 %v129, 2
  %v276 = vpop.permute.xlu0 %275
  %vm277 = vcmask 15360
  %v278 = vsel %vm277, %v270, %v272
  %v279 = vsel %vm277, %v272, %v274
  %v280 = vsel %vm277, %v274, %v276
  %v286 = vmul.f32 %v230, %v270
  %v287 = vmul.f32 %v231, %v278
  %v288 = vmul.f32 %v232, %v279
  %v289 = vmul.f32 %v233, %v280
  %v290 = vmul.f32 %v238, %v276
  %295 = vrot.lane.b32.xlu0 %v150, 16
  %v296 = vpop.permute.xlu0 %295
  %297 = vrot.lane.b32.xlu0 %v151, 16
  %v298 = vpop.permute.xlu0 %297
  %299 = vrot.lane.b32.xlu0 %v152, 16
  %v300 = vpop.permute.xlu0 %299
  %301 = vrot.lane.b32.xlu0 %v153, 16
  %v302 = vpop.permute.xlu0 %301
  %vm303 = vcmask 130048
  %v304 = vsel %vm303, %v296, %v298
  %v305 = vsel %vm303, %v298, %v300
  %v306 = vsel %vm303, %v300, %v302
  %v312 = vmul.f32 %v230, %v296
  %v313 = vmul.f32 %v231, %v304
  %v314 = vmul.f32 %v232, %v305
  %v315 = vmul.f32 %v233, %v306
  %v316 = vmul.f32 %v238, %v302
  %321 = vrot.lane.b32.xlu0 %v162, 17
  %v322 = vpop.permute.xlu0 %321
  %323 = vrot.lane.b32.xlu0 %v163, 17
  %v324 = vpop.permute.xlu0 %323
  %325 = vrot.lane.b32.xlu0 %v164, 17
  %v326 = vpop.permute.xlu0 %325
  %327 = vrot.lane.b32.xlu0 %v165, 17
  %v328 = vpop.permute.xlu0 %327
  %vm329 = vcmask 138240
  %v330 = vsel %vm329, %v322, %v324
  %v331 = vsel %vm329, %v324, %v326
  %v332 = vsel %vm329, %v326, %v328
  %v338 = vmul.f32 %v230, %v322
  %v339 = vmul.f32 %v231, %v330
  %v340 = vmul.f32 %v232, %v331
  %v341 = vmul.f32 %v233, %v332
  %v342 = vmul.f32 %v238, %v328
  %347 = vrot.lane.b32.xlu0 %v174, 18
  %v348 = vpop.permute.xlu0 %347
  %349 = vrot.lane.b32.xlu0 %v175, 18
  %v350 = vpop.permute.xlu0 %349
  %351 = vrot.lane.b32.xlu0 %v176, 18
  %v352 = vpop.permute.xlu0 %351
  %353 = vrot.lane.b32.xlu0 %v177, 18
  %v354 = vpop.permute.xlu0 %353
  %vm355 = vcmask 146432
  %v356 = vsel %vm355, %v348, %v350
  %v357 = vsel %vm355, %v350, %v352
  %v358 = vsel %vm355, %v352, %v354
  %v364 = vmul.f32 %v230, %v348
  %v365 = vmul.f32 %v231, %v356
  %v366 = vmul.f32 %v232, %v357
  %v367 = vmul.f32 %v233, %v358
  %v368 = vmul.f32 %v238, %v354
  %373 = vrot.lane.b32.xlu0 %v202, 32
  %v374 = vpop.permute.xlu0 %373
  %375 = vrot.lane.b32.xlu0 %v203, 32
  %v376 = vpop.permute.xlu0 %375
  %377 = vrot.lane.b32.xlu0 %v204, 32
  %v378 = vpop.permute.xlu0 %377
  %379 = vrot.lane.b32.xlu0 %v205, 32
  %v380 = vpop.permute.xlu0 %379
  %vm381 = vcmask 261120
  %v382 = vsel %vm381, %v374, %v376
  %v383 = vsel %vm381, %v376, %v378
  %v384 = vsel %vm381, %v378, %v380
  %v390 = vmul.f32 %v230, %v374
  %v391 = vmul.f32 %v231, %v382
  %v392 = vmul.f32 %v232, %v383
  %v393 = vmul.f32 %v233, %v384
  %v394 = vmul.f32 %v238, %v380
  %399 = vrot.lane.b32.xlu0 %v214, 33
  %v400 = vpop.permute.xlu0 %399
  %401 = vrot.lane.b32.xlu0 %v215, 33
  %v402 = vpop.permute.xlu0 %401
  %403 = vrot.lane.b32.xlu0 %v216, 33
  %v404 = vpop.permute.xlu0 %403
  %405 = vrot.lane.b32.xlu0 %v217, 33
  %v406 = vpop.permute.xlu0 %405
  %vm407 = vcmask 269312
  %v408 = vsel %vm407, %v400, %v402
  %v409 = vsel %vm407, %v402, %v404
  %v410 = vsel %vm407, %v404, %v406
  %v416 = vmul.f32 %v230, %v400
  %v417 = vmul.f32 %v231, %v408
  %v418 = vmul.f32 %v232, %v409
  %v419 = vmul.f32 %v233, %v410
  %v420 = vmul.f32 %v238, %v406
  %425 = vrot.lane.b32.xlu0 %v226, 34
  %v426 = vpop.permute.xlu0 %425
  %427 = vrot.lane.b32.xlu0 %v227, 34
  %v428 = vpop.permute.xlu0 %427
  %429 = vrot.lane.b32.xlu0 %v228, 34
  %v430 = vpop.permute.xlu0 %429
  %431 = vrot.lane.b32.xlu0 %v229, 34
  %v432 = vpop.permute.xlu0 %431
  %vm433 = vcmask 277504
  %v434 = vsel %vm433, %v426, %v428
  %v435 = vsel %vm433, %v428, %v430
  %v436 = vsel %vm433, %v430, %v432
  %v442 = vmul.f32 %v230, %v426
  %v443 = vmul.f32 %v231, %v434
  %v444 = vmul.f32 %v232, %v435
  %v445 = vmul.f32 %v233, %v436
  %v446 = vmul.f32 %v238, %v432
  %452 = vrot.lane.b32.xlu0 %v260, 127
  %v453 = vpop.permute.xlu0 %452
  %454 = vrot.lane.b32.xlu0 %v261, 127
  %v455 = vpop.permute.xlu0 %454
  %456 = vrot.lane.b32.xlu0 %v262, 127
  %v457 = vpop.permute.xlu0 %456
  %458 = vrot.lane.b32.xlu0 %v263, 127
  %v459 = vpop.permute.xlu0 %458
  %460 = vrot.lane.b32.xlu0 %v264, 127
  %v461 = vpop.permute.xlu0 %460
  %vm462 = vcmask 1039360
  %v463 = vsel %vm462, %v453, %v455
  %v464 = vsel %vm462, %v455, %v457
  %v465 = vsel %vm462, %v457, %v459
  %v466 = vsel %vm462, %v459, %v461
  %476 = vrot.lane.b32.xlu0 %v286, 126
  %v477 = vpop.permute.xlu0 %476
  %478 = vrot.lane.b32.xlu0 %v287, 126
  %v479 = vpop.permute.xlu0 %478
  %480 = vrot.lane.b32.xlu0 %v288, 126
  %v481 = vpop.permute.xlu0 %480
  %482 = vrot.lane.b32.xlu0 %v289, 126
  %v483 = vpop.permute.xlu0 %482
  %484 = vrot.lane.b32.xlu0 %v290, 126
  %v485 = vpop.permute.xlu0 %484
  %vm486 = vcmask 1031168
  %v487 = vsel %vm486, %v477, %v479
  %v488 = vsel %vm486, %v479, %v481
  %v489 = vsel %vm486, %v481, %v483
  %v490 = vsel %vm486, %v483, %v485
  %500 = vrot.lane.b32.xlu0 %v312, 112
  %v501 = vpop.permute.xlu0 %500
  %502 = vrot.lane.b32.xlu0 %v313, 112
  %v503 = vpop.permute.xlu0 %502
  %504 = vrot.lane.b32.xlu0 %v314, 112
  %v505 = vpop.permute.xlu0 %504
  %506 = vrot.lane.b32.xlu0 %v315, 112
  %v507 = vpop.permute.xlu0 %506
  %508 = vrot.lane.b32.xlu0 %v316, 112
  %v509 = vpop.permute.xlu0 %508
  %vm510 = vcmask 916480
  %v511 = vsel %vm510, %v501, %v503
  %v512 = vsel %vm510, %v503, %v505
  %v513 = vsel %vm510, %v505, %v507
  %v514 = vsel %vm510, %v507, %v509
  %524 = vrot.lane.b32.xlu0 %v338, 111
  %v525 = vpop.permute.xlu0 %524
  %526 = vrot.lane.b32.xlu0 %v339, 111
  %v527 = vpop.permute.xlu0 %526
  %528 = vrot.lane.b32.xlu0 %v340, 111
  %v529 = vpop.permute.xlu0 %528
  %530 = vrot.lane.b32.xlu0 %v341, 111
  %v531 = vpop.permute.xlu0 %530
  %532 = vrot.lane.b32.xlu0 %v342, 111
  %v533 = vpop.permute.xlu0 %532
  %vm534 = vcmask 908288
  %v535 = vsel %vm534, %v525, %v527
  %v536 = vsel %vm534, %v527, %v529
  %v537 = vsel %vm534, %v529, %v531
  %v538 = vsel %vm534, %v531, %v533
  %548 = vrot.lane.b32.xlu0 %v364, 110
  %v549 = vpop.permute.xlu0 %548
  %550 = vrot.lane.b32.xlu0 %v365, 110
  %v551 = vpop.permute.xlu0 %550
  %552 = vrot.lane.b32.xlu0 %v366, 110
  %v553 = vpop.permute.xlu0 %552
  %554 = vrot.lane.b32.xlu0 %v367, 110
  %v555 = vpop.permute.xlu0 %554
  %556 = vrot.lane.b32.xlu0 %v368, 110
  %v557 = vpop.permute.xlu0 %556
  %vm558 = vcmask 900096
  %v559 = vsel %vm558, %v549, %v551
  %v560 = vsel %vm558, %v551, %v553
  %v561 = vsel %vm558, %v553, %v555
  %v562 = vsel %vm558, %v555, %v557
  %572 = vrot.lane.b32.xlu0 %v390, 96
  %v573 = vpop.permute.xlu0 %572
  %574 = vrot.lane.b32.xlu0 %v391, 96
  %v575 = vpop.permute.xlu0 %574
  %576 = vrot.lane.b32.xlu0 %v392, 96
  %v577 = vpop.permute.xlu0 %576
  %578 = vrot.lane.b32.xlu0 %v393, 96
  %v579 = vpop.permute.xlu0 %578
  %580 = vrot.lane.b32.xlu0 %v394, 96
  %v581 = vpop.permute.xlu0 %580
  %vm582 = vcmask 785408
  %v583 = vsel %vm582, %v573, %v575
  %v584 = vsel %vm582, %v575, %v577
  %v585 = vsel %vm582, %v577, %v579
  %v586 = vsel %vm582, %v579, %v581
  %596 = vrot.lane.b32.xlu0 %v416, 95
  %v597 = vpop.permute.xlu0 %596
  %598 = vrot.lane.b32.xlu0 %v417, 95
  %v599 = vpop.permute.xlu0 %598
  %600 = vrot.lane.b32.xlu0 %v418, 95
  %v601 = vpop.permute.xlu0 %600
  %602 = vrot.lane.b32.xlu0 %v419, 95
  %v603 = vpop.permute.xlu0 %602
  %604 = vrot.lane.b32.xlu0 %v420, 95
  %v605 = vpop.permute.xlu0 %604
  %vm606 = vcmask 777216
  %v607 = vsel %vm606, %v597, %v599
  %v608 = vsel %vm606, %v599, %v601
  %v609 = vsel %vm606, %v601, %v603
  %v610 = vsel %vm606, %v603, %v605
  %620 = vrot.lane.b32.xlu0 %v442, 94
  %v621 = vpop.permute.xlu0 %620
  %622 = vrot.lane.b32.xlu0 %v443, 94
  %v623 = vpop.permute.xlu0 %622
  %624 = vrot.lane.b32.xlu0 %v444, 94
  %v625 = vpop.permute.xlu0 %624
  %626 = vrot.lane.b32.xlu0 %v445, 94
  %v627 = vpop.permute.xlu0 %626
  %628 = vrot.lane.b32.xlu0 %v446, 94
  %v629 = vpop.permute.xlu0 %628
  %vm630 = vcmask 769024
  %v631 = vsel %vm630, %v621, %v623
  %v632 = vsel %vm630, %v623, %v625
  %v633 = vsel %vm630, %v625, %v627
  %v634 = vsel %vm630, %v627, %v629
  %v639 = vld [vmem:[%s1] sm:$0xff]
  %v640 = vld [vmem:[%s2] sm:$0xff]
  %642 = vset.pattern.permute.xlu0 0
  %643 = vperm.xlu0 %642, %v640
  %v644 = vpop.permute.xlu0 %643
  %vm646 = vcmask 588800
  %v648 = vsel %vm646, %v639, 0
  %650 = vmatpush.msra.mxu0 0.0
  %651 = vmatpush.msra.mxu0 0.0
  %652 = vmatpush.msra.mxu0 0.0
  %653 = vmatpush.msra.mxu0 0.0
  %654 = vmatpush.msra.mxu0 0.0
  %655 = vmatpush.msra.mxu0 0.0
  %656 = vmatpush.msra.mxu0 0.0
  %657 = vmatpush.msra.mxu0 %v631
  %658 = vmatpush.msra.mxu0 %v607
  %659 = vmatpush.msra.mxu0 %v583
  %660 = vmatpush.msra.mxu0 %v559
  %661 = vmatpush.msra.mxu0 %v535
  %662 = vmatpush.msra.mxu0 %v511
  %663 = vmatpush.msra.mxu0 %v487
  %664 = vmatpush.msra.mxu0 %v463
  %665 = vmatpush.msra.mxu0 %v234
  %666 = vmatmul.f32.gmra.mxu0 %v648
  %v667 = vpop.f32.mrf.mxu0
  %v668 = vadd.f32 %v644, %v667
  %669 = vdwg.mxu0
  %670 = vmatpush.msra.mxu0 0.0
  %671 = vmatpush.msra.mxu0 0.0
  %672 = vmatpush.msra.mxu0 0.0
  %673 = vmatpush.msra.mxu0 0.0
  %674 = vmatpush.msra.mxu0 0.0
  %675 = vmatpush.msra.mxu0 0.0
  %676 = vmatpush.msra.mxu0 0.0
  %677 = vmatpush.msra.mxu0 %v632
  %678 = vmatpush.msra.mxu0 %v608
  %679 = vmatpush.msra.mxu0 %v584
  %680 = vmatpush.msra.mxu0 %v560
  %681 = vmatpush.msra.mxu0 %v536
  %682 = vmatpush.msra.mxu0 %v512
  %683 = vmatpush.msra.mxu0 %v488
  %684 = vmatpush.msra.mxu0 %v464
  %685 = vmatpush.msra.mxu0 %v235
  %686 = vmatmul.f32.gmra.mxu0 %v648
  %v687 = vpop.f32.mrf.mxu0
  %v688 = vadd.f32 %v644, %v687
  %689 = vdwg.mxu0
  %690 = vmatpush.msra.mxu0 0.0
  %691 = vmatpush.msra.mxu0 0.0
  %692 = vmatpush.msra.mxu0 0.0
  %693 = vmatpush.msra.mxu0 0.0
  %694 = vmatpush.msra.mxu0 0.0
  %695 = vmatpush.msra.mxu0 0.0
  %696 = vmatpush.msra.mxu0 0.0
  %697 = vmatpush.msra.mxu0 %v633
  %698 = vmatpush.msra.mxu0 %v609
  %699 = vmatpush.msra.mxu0 %v585
  %700 = vmatpush.msra.mxu0 %v561
  %701 = vmatpush.msra.mxu0 %v537
  %702 = vmatpush.msra.mxu0 %v513
  %703 = vmatpush.msra.mxu0 %v489
  %704 = vmatpush.msra.mxu0 %v465
  %705 = vmatpush.msra.mxu0 %v236
  %706 = vmatmul.f32.gmra.mxu0 %v648
  %v707 = vpop.f32.mrf.mxu0
  %v708 = vadd.f32 %v644, %v707
  %709 = vdwg.mxu0
  %710 = vmatpush.msra.mxu0 0.0
  %711 = vmatpush.msra.mxu0 0.0
  %712 = vmatpush.msra.mxu0 0.0
  %713 = vmatpush.msra.mxu0 0.0
  %714 = vmatpush.msra.mxu0 0.0
  %715 = vmatpush.msra.mxu0 0.0
  %716 = vmatpush.msra.mxu0 0.0
  %717 = vmatpush.msra.mxu0 %v634
  %718 = vmatpush.msra.mxu0 %v610
  %719 = vmatpush.msra.mxu0 %v586
  %720 = vmatpush.msra.mxu0 %v562
  %721 = vmatpush.msra.mxu0 %v538
  %722 = vmatpush.msra.mxu0 %v514
  %723 = vmatpush.msra.mxu0 %v490
  %724 = vmatpush.msra.mxu0 %v466
  %725 = vmatpush.msra.mxu0 %v237
  %726 = vmatmul.f32.gmra.mxu0 %v648
  %v727 = vpop.f32.mrf.mxu0
  %v728 = vadd.f32 %v644, %v727
  %729 = vdwg.mxu0
  %v730 = vmax.f32 %v668, 0.0
  %v731 = vmax.f32 %v688, 0.0
  %v732 = vmax.f32 %v708, 0.0
  %v733 = vmax.f32 %v728, 0.0
  %734 = vst [vmem:[#allocation2] sm:$0xff] 0.0
  %735 = vst [vmem:[#allocation2 + $0x8] sm:$0xff] 0.0
  %736 = vst [vmem:[#allocation2 + $0x10] sm:$0xff] 0.0
  %737 = vst [vmem:[#allocation2 + $0x18] sm:$0xff] 0.0
  %738 = vst.msk [vmem:[#allocation2 + $0x20] sm:$0xff] %vm433, 0.0
  %743 = vrot.lane.b32.xlu0 %v730, 17
  %v744 = vpop.permute.xlu0 %743
  %745 = vrot.lane.b32.xlu0 %v731, 17
  %v746 = vpop.permute.xlu0 %745
  %747 = vrot.lane.b32.xlu0 %v732, 17
  %v748 = vpop.permute.xlu0 %747
  %749 = vrot.lane.b32.xlu0 %v733, 17
  %v750 = vpop.permute.xlu0 %749
  %v751 = vsel %vm329, %v744, %v746
  %v752 = vsel %vm329, %v746, %v748
  %v753 = vsel %vm329, %v748, %v750
  %vm759 = vcmask 1047688
  %760 = vst.msk [vmem:[#allocation2] sm:$0xff] %vm759, %v744
  %761 = vst [vmem:[#allocation2 + $0x8] sm:$0xff] %v751
  %762 = vst [vmem:[#allocation2 + $0x10] sm:$0xff] %v752
  %763 = vst [vmem:[#allocation2 + $0x18] sm:$0xff] %v753
  %764 = vst.msk [vmem:[#allocation2 + $0x20] sm:$0xff] %vm329, %v750
  %v765 = vld [vmem:[#allocation2] sm:$0xff]
  %v766 = vld [vmem:[#allocation2 + $0x8] sm:$0xff]
  %v767 = vld [vmem:[#allocation2 + $0x10] sm:$0xff]
  %v768 = vld [vmem:[#allocation2 + $0x18] sm:$0xff]
  %v769 = vmul.f32 %v765, %v82
  %v770 = vmul.f32 %v766, %v83
  %v771 = vmul.f32 %v767, %v84
  %v772 = vmul.f32 %v768, %v85
  %v773 = vld [vmem:[#allocation2 + $0x20] sm:$0xff]
  %v774 = vmul.f32 %v765, %v244
  %v775 = vmul.f32 %v766, %v252
  %v776 = vmul.f32 %v767, %v253
  %v777 = vmul.f32 %v768, %v254
  %v778 = vmul.f32 %v773, %v250
  %v779 = vmul.f32 %v765, %v270
  %v780 = vmul.f32 %v766, %v278
  %v781 = vmul.f32 %v767, %v279
  %v782 = vmul.f32 %v768, %v280
  %v783 = vmul.f32 %v773, %v276
  %v784 = vmul.f32 %v765, %v296
  %v785 = vmul.f32 %v766, %v304
  %v786 = vmul.f32 %v767, %v305
  %v787 = vmul.f32 %v768, %v306
  %v788 = vmul.f32 %v773, %v302
  %v789 = vmul.f32 %v765, %v322
  %v790 = vmul.f32 %v766, %v330
  %v791 = vmul.f32 %v767, %v331
  %v792 = vmul.f32 %v768, %v332
  %v793 = vmul.f32 %v773, %v328
  %v794 = vmul.f32 %v765, %v348
  %v795 = vmul.f32 %v766, %v356
  %v796 = vmul.f32 %v767, %v357
  %v797 = vmul.f32 %v768, %v358
  %v798 = vmul.f32 %v773, %v354
  %v799 = vmul.f32 %v765, %v374
  %v800 = vmul.f32 %v766, %v382
  %v801 = vmul.f32 %v767, %v383
  %v802 = vmul.f32 %v768, %v384
  %v803 = vmul.f32 %v773, %v380
  %v804 = vmul.f32 %v765, %v400
  %v805 = vmul.f32 %v766, %v408
  %v806 = vmul.f32 %v767, %v409
  %v807 = vmul.f32 %v768, %v410
  %v808 = vmul.f32 %v773, %v406
  %v809 = vmul.f32 %v765, %v426
  %v810 = vmul.f32 %v766, %v434
  %v811 = vmul.f32 %v767, %v435
  %v812 = vmul.f32 %v768, %v436
  %v813 = vmul.f32 %v773, %v432
  %819 = vrot.lane.b32.xlu0 %v774, 127
  %v820 = vpop.permute.xlu0 %819
  %821 = vrot.lane.b32.xlu0 %v775, 127
  %v822 = vpop.permute.xlu0 %821
  %823 = vrot.lane.b32.xlu0 %v776, 127
  %v824 = vpop.permute.xlu0 %823
  %825 = vrot.lane.b32.xlu0 %v777, 127
  %v826 = vpop.permute.xlu0 %825
  %827 = vrot.lane.b32.xlu0 %v778, 127
  %v828 = vpop.permute.xlu0 %827
  %v829 = vsel %vm462, %v820, %v822
  %v830 = vsel %vm462, %v822, %v824
  %v831 = vsel %vm462, %v824, %v826
  %v832 = vsel %vm462, %v826, %v828
  %842 = vrot.lane.b32.xlu0 %v779, 126
  %v843 = vpop.permute.xlu0 %842
  %844 = vrot.lane.b32.xlu0 %v780, 126
  %v845 = vpop.permute.xlu0 %844
  %846 = vrot.lane.b32.xlu0 %v781, 126
  %v847 = vpop.permute.xlu0 %846
  %848 = vrot.lane.b32.xlu0 %v782, 126
  %v849 = vpop.permute.xlu0 %848
  %850 = vrot.lane.b32.xlu0 %v783, 126
  %v851 = vpop.permute.xlu0 %850
  %v852 = vsel %vm486, %v843, %v845
  %v853 = vsel %vm486, %v845, %v847
  %v854 = vsel %vm486, %v847, %v849
  %v855 = vsel %vm486, %v849, %v851
  %865 = vrot.lane.b32.xlu0 %v784, 112
  %v866 = vpop.permute.xlu0 %865
  %867 = vrot.lane.b32.xlu0 %v785, 112
  %v868 = vpop.permute.xlu0 %867
  %869 = vrot.lane.b32.xlu0 %v786, 112
  %v870 = vpop.permute.xlu0 %869
  %871 = vrot.lane.b32.xlu0 %v787, 112
  %v872 = vpop.permute.xlu0 %871
  %873 = vrot.lane.b32.xlu0 %v788, 112
  %v874 = vpop.permute.xlu0 %873
  %v875 = vsel %vm510, %v866, %v868
  %v876 = vsel %vm510, %v868, %v870
  %v877 = vsel %vm510, %v870, %v872
  %v878 = vsel %vm510, %v872, %v874
  %888 = vrot.lane.b32.xlu0 %v789, 111
  %v889 = vpop.permute.xlu0 %888
  %890 = vrot.lane.b32.xlu0 %v790, 111
  %v891 = vpop.permute.xlu0 %890
  %892 = vrot.lane.b32.xlu0 %v791, 111
  %v893 = vpop.permute.xlu0 %892
  %894 = vrot.lane.b32.xlu0 %v792, 111
  %v895 = vpop.permute.xlu0 %894
  %896 = vrot.lane.b32.xlu0 %v793, 111
  %v897 = vpop.permute.xlu0 %896
  %v898 = vsel %vm534, %v889, %v891
  %v899 = vsel %vm534, %v891, %v893
  %v900 = vsel %vm534, %v893, %v895
  %v901 = vsel %vm534, %v895, %v897
  %911 = vrot.lane.b32.xlu0 %v794, 110
  %v912 = vpop.permute.xlu0 %911
  %913 = vrot.lane.b32.xlu0 %v795, 110
  %v914 = vpop.permute.xlu0 %913
  %915 = vrot.lane.b32.xlu0 %v796, 110
  %v916 = vpop.permute.xlu0 %915
  %917 = vrot.lane.b32.xlu0 %v797, 110
  %v918 = vpop.permute.xlu0 %917
  %919 = vrot.lane.b32.xlu0 %v798, 110
  %v920 = vpop.permute.xlu0 %919
  %v921 = vsel %vm558, %v912, %v914
  %v922 = vsel %vm558, %v914, %v916
  %v923 = vsel %vm558, %v916, %v918
  %v924 = vsel %vm558, %v918, %v920
  %934 = vrot.lane.b32.xlu0 %v799, 96
  %v935 = vpop.permute.xlu0 %934
  %936 = vrot.lane.b32.xlu0 %v800, 96
  %v937 = vpop.permute.xlu0 %936
  %938 = vrot.lane.b32.xlu0 %v801, 96
  %v939 = vpop.permute.xlu0 %938
  %940 = vrot.lane.b32.xlu0 %v802, 96
  %v941 = vpop.permute.xlu0 %940
  %942 = vrot.lane.b32.xlu0 %v803, 96
  %v943 = vpop.permute.xlu0 %942
  %v944 = vsel %vm582, %v935, %v937
  %v945 = vsel %vm582, %v937, %v939
  %v946 = vsel %vm582, %v939, %v941
  %v947 = vsel %vm582, %v941, %v943
  %957 = vrot.lane.b32.xlu0 %v804, 95
  %v958 = vpop.permute.xlu0 %957
  %959 = vrot.lane.b32.xlu0 %v805, 95
  %v960 = vpop.permute.xlu0 %959
  %961 = vrot.lane.b32.xlu0 %v806, 95
  %v962 = vpop.permute.xlu0 %961
  %963 = vrot.lane.b32.xlu0 %v807, 95
  %v964 = vpop.permute.xlu0 %963
  %965 = vrot.lane.b32.xlu0 %v808, 95
  %v966 = vpop.permute.xlu0 %965
  %v967 = vsel %vm606, %v958, %v960
  %v968 = vsel %vm606, %v960, %v962
  %v969 = vsel %vm606, %v962, %v964
  %v970 = vsel %vm606, %v964, %v966
  %980 = vrot.lane.b32.xlu0 %v809, 94
  %v981 = vpop.permute.xlu0 %980
  %982 = vrot.lane.b32.xlu0 %v810, 94
  %v983 = vpop.permute.xlu0 %982
  %984 = vrot.lane.b32.xlu0 %v811, 94
  %v985 = vpop.permute.xlu0 %984
  %986 = vrot.lane.b32.xlu0 %v812, 94
  %v987 = vpop.permute.xlu0 %986
  %988 = vrot.lane.b32.xlu0 %v813, 94
  %v989 = vpop.permute.xlu0 %988
  %v990 = vsel %vm630, %v981, %v983
  %v991 = vsel %vm630, %v983, %v985
  %v992 = vsel %vm630, %v985, %v987
  %v993 = vsel %vm630, %v987, %v989
  %v998 = vld [vmem:[%s3] sm:$0xff]
  %v999 = vld [vmem:[%s4] sm:$0xff]
  %1001 = vset.pattern.permute.xlu0 0
  %1002 = vperm.xlu0 %1001, %v999
  %v1003 = vpop.permute.xlu0 %1002
  %v1006 = vsel %vm646, %v998, 0
  %1008 = vmatpush.msra.mxu0 0.0
  %1009 = vmatpush.msra.mxu0 0.0
  %1010 = vmatpush.msra.mxu0 0.0
  %1011 = vmatpush.msra.mxu0 0.0
  %1012 = vmatpush.msra.mxu0 0.0
  %1013 = vmatpush.msra.mxu0 0.0
  %1014 = vmatpush.msra.mxu0 0.0
  %1015 = vmatpush.msra.mxu0 %v990
  %1016 = vmatpush.msra.mxu0 %v967
  %1017 = vmatpush.msra.mxu0 %v944
  %1018 = vmatpush.msra.mxu0 %v921
  %1019 = vmatpush.msra.mxu0 %v898
  %1020 = vmatpush.msra.mxu0 %v875
  %1021 = vmatpush.msra.mxu0 %v852
  %1022 = vmatpush.msra.mxu0 %v829
  %1023 = vmatpush.msra.mxu0 %v769
  %1024 = vmatmul.f32.gmra.mxu0 %v1006
  %v1025 = vpop.f32.mrf.mxu0
  %v1026 = vadd.f32 %v1003, %v1025
  %1027 = vdwg.mxu0
  %1028 = vmatpush.msra.mxu0 0.0
  %1029 = vmatpush.msra.mxu0 0.0
  %1030 = vmatpush.msra.mxu0 0.0
  %1031 = vmatpush.msra.mxu0 0.0
  %1032 = vmatpush.msra.mxu0 0.0
  %1033 = vmatpush.msra.mxu0 0.0
  %1034 = vmatpush.msra.mxu0 0.0
  %1035 = vmatpush.msra.mxu0 %v991
  %1036 = vmatpush.msra.mxu0 %v968
  %1037 = vmatpush.msra.mxu0 %v945
  %1038 = vmatpush.msra.mxu0 %v922
  %1039 = vmatpush.msra.mxu0 %v899
  %1040 = vmatpush.msra.mxu0 %v876
  %1041 = vmatpush.msra.mxu0 %v853
  %1042 = vmatpush.msra.mxu0 %v830
  %1043 = vmatpush.msra.mxu0 %v770
  %1044 = vmatmul.f32.gmra.mxu0 %v1006
  %v1045 = vpop.f32.mrf.mxu0
  %v1046 = vadd.f32 %v1003, %v1045
  %1047 = vdwg.mxu0
  %1048 = vmatpush.msra.mxu0 0.0
  %1049 = vmatpush.msra.mxu0 0.0
  %1050 = vmatpush.msra.mxu0 0.0
  %1051 = vmatpush.msra.mxu0 0.0
  %1052 = vmatpush.msra.mxu0 0.0
  %1053 = vmatpush.msra.mxu0 0.0
  %1054 = vmatpush.msra.mxu0 0.0
  %1055 = vmatpush.msra.mxu0 %v992
  %1056 = vmatpush.msra.mxu0 %v969
  %1057 = vmatpush.msra.mxu0 %v946
  %1058 = vmatpush.msra.mxu0 %v923
  %1059 = vmatpush.msra.mxu0 %v900
  %1060 = vmatpush.msra.mxu0 %v877
  %1061 = vmatpush.msra.mxu0 %v854
  %1062 = vmatpush.msra.mxu0 %v831
  %1063 = vmatpush.msra.mxu0 %v771
  %1064 = vmatmul.f32.gmra.mxu0 %v1006
  %v1065 = vpop.f32.mrf.mxu0
  %v1066 = vadd.f32 %v1003, %v1065
  %1067 = vdwg.mxu0
  %1068 = vmatpush.msra.mxu0 0.0
  %1069 = vmatpush.msra.mxu0 0.0
  %1070 = vmatpush.msra.mxu0 0.0
  %1071 = vmatpush.msra.mxu0 0.0
  %1072 = vmatpush.msra.mxu0 0.0
  %1073 = vmatpush.msra.mxu0 0.0
  %1074 = vmatpush.msra.mxu0 0.0
  %1075 = vmatpush.msra.mxu0 %v993
  %1076 = vmatpush.msra.mxu0 %v970
  %1077 = vmatpush.msra.mxu0 %v947
  %1078 = vmatpush.msra.mxu0 %v924
  %1079 = vmatpush.msra.mxu0 %v901
  %1080 = vmatpush.msra.mxu0 %v878
  %1081 = vmatpush.msra.mxu0 %v855
  %1082 = vmatpush.msra.mxu0 %v832
  %1083 = vmatpush.msra.mxu0 %v772
  %1084 = vmatmul.f32.gmra.mxu0 %v1006
  %v1085 = vpop.f32.mrf.mxu0
  %v1086 = vadd.f32 %v1003, %v1085
  %1087 = vdwg.mxu0
  %v1088 = vmax.f32 %v1026, 0.0
  %v1089 = vmax.f32 %v1046, 0.0
  %v1090 = vmax.f32 %v1066, 0.0
  %v1091 = vmax.f32 %v1086, 0.0
  %v1092 = vld [vmem:[%s7] sm:$0xff]
  %v1093 = vld [vmem:[%s7 + $0x8] sm:$0xff]
  %v1094 = vld [vmem:[%s7 + $0x10] sm:$0xff]
  %v1095 = vld [vmem:[%s7 + $0x18] sm:$0xff]
  %v1096 = vld [vmem:[%s7 + $0x20] sm:$0xff]
  %v1097 = vld [vmem:[%s7 + $0x28] sm:$0xff]
  %v1098 = vld [vmem:[%s7 + $0x30] sm:$0xff]
  %v1099 = vld [vmem:[%s7 + $0x38] sm:$0xff]
  %v1100 = vld [vmem:[%s7 + $0x40] sm:$0xff]
  %v1101 = vld [vmem:[%s7 + $0x48] sm:$0xff]
  %v1102 = vld [vmem:[%s7 + $0x50] sm:$0xff]
  %v1103 = vld [vmem:[%s7 + $0x58] sm:$0xff]
  %v1104 = vld [vmem:[%s7 + $0x60] sm:$0xff]
  %v1105 = vld [vmem:[%s7 + $0x68] sm:$0xff]
  %v1106 = vld [vmem:[%s7 + $0x70] sm:$0xff]
  %v1107 = vld [vmem:[%s7 + $0x78] sm:$0xff]
  %v1108 = vld [vmem:[%s7 + $0x80] sm:$0xff]
  %v1109 = vld [vmem:[%s7 + $0x88] sm:$0xff]
  %v1110 = vld [vmem:[%s7 + $0x90] sm:$0xff]
  %v1111 = vld [vmem:[%s7 + $0x98] sm:$0xff]
  %v1112 = vld [vmem:[%s7 + $0xa0] sm:$0xff]
  %v1113 = vld [vmem:[%s7 + $0xa8] sm:$0xff]
  %v1114 = vld [vmem:[%s7 + $0xb0] sm:$0xff]
  %v1115 = vld [vmem:[%s7 + $0xb8] sm:$0xff]
  %v1116 = vld [vmem:[%s7 + $0xc0] sm:$0xff]
  %v1117 = vld [vmem:[%s7 + $0xc8] sm:$0xff]
  %v1118 = vld [vmem:[%s7 + $0xd0] sm:$0xff]
  %v1119 = vld [vmem:[%s7 + $0xd8] sm:$0xff]
  %v1120 = vld [vmem:[%s7 + $0xe0] sm:$0xff]
  %v1121 = vld [vmem:[%s7 + $0xe8] sm:$0xff]
  %v1122 = vld [vmem:[%s7 + $0xf0] sm:$0xff]
  %v1123 = vld [vmem:[%s7 + $0xf8] sm:$0xff]
  %v1124 = vld [vmem:[%s7 + $0x100] sm:$0xff]
  %v1125 = vld [vmem:[%s7 + $0x108] sm:$0xff]
  %v1126 = vld [vmem:[%s7 + $0x110] sm:$0xff]
  %v1127 = vld [vmem:[%s7 + $0x118] sm:$0xff]
  %v1128 = vld [vmem:[%s7 + $0x120] sm:$0xff]
  %v1129 = vld [vmem:[%s7 + $0x128] sm:$0xff]
  %v1130 = vld [vmem:[%s7 + $0x130] sm:$0xff]
  %v1131 = vld [vmem:[%s7 + $0x138] sm:$0xff]
  %v1132 = vld [vmem:[%s7 + $0x140] sm:$0xff]
  %v1133 = vld [vmem:[%s7 + $0x148] sm:$0xff]
  %v1134 = vld [vmem:[%s7 + $0x150] sm:$0xff]
  %v1135 = vld [vmem:[%s7 + $0x158] sm:$0xff]
  %v1136 = vld [vmem:[%s7 + $0x160] sm:$0xff]
  %v1137 = vld [vmem:[%s7 + $0x168] sm:$0xff]
  %v1138 = vld [vmem:[%s7 + $0x170] sm:$0xff]
  %v1139 = vld [vmem:[%s7 + $0x178] sm:$0xff]
  %v1140 = vld [vmem:[%s7 + $0x180] sm:$0xff]
  %v1141 = vld [vmem:[%s7 + $0x188] sm:$0xff]
  %v1142 = vld [vmem:[%s7 + $0x190] sm:$0xff]
  %v1143 = vld [vmem:[%s7 + $0x198] sm:$0xff]
  %v1144 = vld [vmem:[%s7 + $0x1a0] sm:$0xff]
  %v1145 = vld [vmem:[%s7 + $0x1a8] sm:$0xff]
  %v1146 = vld [vmem:[%s7 + $0x1b0] sm:$0xff]
  %v1147 = vld [vmem:[%s7 + $0x1b8] sm:$0xff]
  %v1148 = vld [vmem:[%s7 + $0x1c0] sm:$0xff]
  %v1149 = vld [vmem:[%s7 + $0x1c8] sm:$0xff]
  %v1150 = vld [vmem:[%s7 + $0x1d0] sm:$0xff]
  %v1151 = vld [vmem:[%s7 + $0x1d8] sm:$0xff]
  %v1152 = vld [vmem:[%s7 + $0x1e0] sm:$0xff]
  %v1153 = vld [vmem:[%s7 + $0x1e8] sm:$0xff]
  %v1154 = vld [vmem:[%s7 + $0x1f0] sm:$0xff]
  %v1155 = vld [vmem:[%s7 + $0x1f8] sm:$0xff]
  %1156 = vmatpush.msra.mxu0 %v1107
  %1157 = vmatpush.msra.mxu0 %v1106
  %1158 = vmatpush.msra.mxu0 %v1105
  %1159 = vmatpush.msra.mxu0 %v1104
  %1160 = vmatpush.msra.mxu0 %v1103
  %1161 = vmatpush.msra.mxu0 %v1102
  %1162 = vmatpush.msra.mxu0 %v1101
  %1163 = vmatpush.msra.mxu0 %v1100
  %1164 = vmatpush.msra.mxu0 %v1099
  %1165 = vmatpush.msra.mxu0 %v1098
  %1166 = vmatpush.msra.mxu0 %v1097
  %1167 = vmatpush.msra.mxu0 %v1096
  %1168 = vmatpush.msra.mxu0 %v1095
  %1169 = vmatpush.msra.mxu0 %v1094
  %1170 = vmatpush.msra.mxu0 %v1093
  %1171 = vmatpush.msra.mxu0 %v1092
  %1172 = vmatmul.f32.gmra.mxu0 %v1088
  %v1173 = vpop.f32.mrf.mxu0
  %v1174 = vadd.f32 0.0, %v1173
  %1175 = vdwg.mxu0
  %1176 = vmatpush.msra.mxu0 %v1123
  %1177 = vmatpush.msra.mxu0 %v1122
  %1178 = vmatpush.msra.mxu0 %v1121
  %1179 = vmatpush.msra.mxu0 %v1120
  %1180 = vmatpush.msra.mxu0 %v1119
  %1181 = vmatpush.msra.mxu0 %v1118
  %1182 = vmatpush.msra.mxu0 %v1117
  %1183 = vmatpush.msra.mxu0 %v1116
  %1184 = vmatpush.msra.mxu0 %v1115
  %1185 = vmatpush.msra.mxu0 %v1114
  %1186 = vmatpush.msra.mxu0 %v1113
  %1187 = vmatpush.msra.mxu0 %v1112
  %1188 = vmatpush.msra.mxu0 %v1111
  %1189 = vmatpush.msra.mxu0 %v1110
  %1190 = vmatpush.msra.mxu0 %v1109
  %1191 = vmatpush.msra.mxu0 %v1108
  %1192 = vmatmul.f32.gmra.mxu0 %v1089
  %v1193 = vpop.f32.mrf.mxu0
  %v1194 = vadd.f32 %v1174, %v1193
  %1195 = vdwg.mxu0
  %1196 = vmatpush.msra.mxu0 %v1139
  %1197 = vmatpush.msra.mxu0 %v1138
  %1198 = vmatpush.msra.mxu0 %v1137
  %1199 = vmatpush.msra.mxu0 %v1136
  %1200 = vmatpush.msra.mxu0 %v1135
  %1201 = vmatpush.msra.mxu0 %v1134
  %1202 = vmatpush.msra.mxu0 %v1133
  %1203 = vmatpush.msra.mxu0 %v1132
  %1204 = vmatpush.msra.mxu0 %v1131
  %1205 = vmatpush.msra.mxu0 %v1130
  %1206 = vmatpush.msra.mxu0 %v1129
  %1207 = vmatpush.msra.mxu0 %v1128
  %1208 = vmatpush.msra.mxu0 %v1127
  %1209 = vmatpush.msra.mxu0 %v1126
  %1210 = vmatpush.msra.mxu0 %v1125
  %1211 = vmatpush.msra.mxu0 %v1124
  %1212 = vmatmul.f32.gmra.mxu0 %v1090
  %v1213 = vpop.f32.mrf.mxu0
  %v1214 = vadd.f32 %v1194, %v1213
  %1215 = vdwg.mxu0
  %1216 = vmatpush.msra.mxu0 %v1155
  %1217 = vmatpush.msra.mxu0 %v1154
  %1218 = vmatpush.msra.mxu0 %v1153
  %1219 = vmatpush.msra.mxu0 %v1152
  %1220 = vmatpush.msra.mxu0 %v1151
  %1221 = vmatpush.msra.mxu0 %v1150
  %1222 = vmatpush.msra.mxu0 %v1149
  %1223 = vmatpush.msra.mxu0 %v1148
  %1224 = vmatpush.msra.mxu0 %v1147
  %1225 = vmatpush.msra.mxu0 %v1146
  %1226 = vmatpush.msra.mxu0 %v1145
  %1227 = vmatpush.msra.mxu0 %v1144
  %1228 = vmatpush.msra.mxu0 %v1143
  %1229 = vmatpush.msra.mxu0 %v1142
  %1230 = vmatpush.msra.mxu0 %v1141
  %1231 = vmatpush.msra.mxu0 %v1140
  %1232 = vmatmul.f32.gmra.mxu0 %v1091
  %v1233 = vpop.f32.mrf.mxu0
  %v1234 = vadd.f32 %v1214, %v1233
  %1235 = vdwg.mxu0
  %v1236 = vld [vmem:[%s5] sm:$0xff]
  %v1237 = vld [vmem:[%s5 + $0x8] sm:$0x3]
  %v1238 = vld [vmem:[%s6] sm:$0xff]
  %v1239 = vld [vmem:[%s6 + $0x8] sm:$0x3]
  %1241 = vset.pattern.permute.xlu0 0
  %1242 = vperm.xlu0 %1241, %v1238
  %v1243 = vpop.permute.xlu0 %1242
  %1246 = vset.pattern.permute.xlu0 0
  %1247 = vperm.xlu0 %1246, %v1239
  %v1248 = vpop.permute.xlu0 %1247
  %vm1250 = vcmask 64512
  %v1252 = vsel %vm1250, %v1236, 0
  %v1255 = vsel %vm1250, %v1237, 0
  %1257 = vmatpush.msra.mxu0 0.0
  %1258 = vmatpush.msra.mxu0 0.0
  %1259 = vmatpush.msra.mxu0 0.0
  %1260 = vmatpush.msra.mxu0 0.0
  %1261 = vmatpush.msra.mxu0 0.0
  %1262 = vmatpush.msra.mxu0 0.0
  %1263 = vmatpush.msra.mxu0 0.0
  %1264 = vmatpush.msra.mxu0 0.0
  %1265 = vmatpush.msra.mxu0 0.0
  %1266 = vmatpush.msra.mxu0 0.0
  %1267 = vmatpush.msra.mxu0 0.0
  %1268 = vmatpush.msra.mxu0 0.0
  %1269 = vmatpush.msra.mxu0 0.0
  %1270 = vmatpush.msra.mxu0 0.0
  %1271 = vmatpush.msra.mxu0 0.0
  %1272 = vmatpush.msra.mxu0 %v1234
  %1273 = vmatmul.f32.gmra.mxu0 %v1252
  %v1274 = vpop.f32.mrf.mxu0
  %v1275 = vadd.f32 %v1243, %v1274
  %1276 = vmatmul.f32.gmra.mxu0 %v1255
  %v1277 = vpop.f32.mrf.mxu0
  %v1278 = vadd.f32 %v1248, %v1277
  %1279 = vdwg.mxu0
  %1280 = vst.msk [vmem:[%s8] sm:$0xff] %vm277, %v1275
  %vm1281 = vcmask 9216
  %1282 = vst.msk [vmem:[%s8 + $0x8] sm:$0x3] %vm1281, %v1278
  // Predicated region
  $region34: #{forward_pallas.1} parent=0 // pred_check
    _
  $region35: #{forward_pallas.1} parent=0 // pred_check_branch
    %1284 = sbr.rel (0) target = $region37
  $region36: #{forward_pallas.1} parent=0 // pred_region
    _
  $region37: #{forward_pallas.1} parent=0 // pred_fallthru
    _
  // Predicated region
  $region38: #{forward_pallas.1} parent=0 // pred_check
    _
  $region39: #{forward_pallas.1} parent=0 // pred_check_branch
    %1286 = sbr.rel (0) target = $region41
  $region40: #{forward_pallas.1} parent=0 // pred_region
    _
  $region41: #{forward_pallas.1} parent=0 // pred_fallthru
    _

</llo_original>
